<compile_context>
chip_gen: v7x
topology: tpu7x:2x2x1
jax: 0.10.0
libtpu: 0.0.40
codegen_flags: <defaults>
</compile_context>

<pallas_src>
import functools

import jax
import jax.numpy as jnp
import numpy as np
from jax import lax
from jax.experimental import pallas as pl
from jax.experimental.pallas import tpu as pltpu

LANE = 128      # lane tile width
SUBLANE = 8     # sublane tile height


def _round_up(x, m):
    return ((x + m - 1) // m) * m


# -----------------------------------------------------------------------------
# Pallas kernel: full forward pass for one batch tile, everything in VMEM.
# -----------------------------------------------------------------------------
def qnet_kernel(
    x_ref,        # (T, BT, O)    f32   time-major padded observations (batch tile)
    lenm1_ref,    # (BT, 1)       i32   true sequence length - 1 (-1 for pad rows)
    amask_ref,    # (BT, Ap)      f32   additive action mask (0 or -inf)
    wih_ref,      # (O, 3*Hp)     bf16  GRU W_ih^T, gates lane-aligned at 0/Hp/2Hp
    bih_ref,      # (1, 3*Hp)     f32
    whh_ref,      # (Hp, 3*Hp)    bf16  GRU W_hh^T, gates lane-aligned
    bhh_ref,      # (1, 3*Hp)     f32
    w1_ref,       # (Hp, Hp)      bf16  fc1 weight^T (zero-padded)
    b1_ref,       # (1, Hp)       f32
    w2_ref,       # (Hp, Ap)      bf16  fc2 weight^T (zero-padded)
    b2_ref,       # (1, Ap)       f32
    q_ref,        # (BT, Ap)      f32   output Q-values (lane-dense store)
    gx_ref,       # (T, BT, 3*Hp) f32   VMEM scratch: hoisted input projections
):
    T, BT, O = x_ref.shape
    Hp = whh_ref.shape[0]

    wih = wih_ref[...]                       # bf16
    bih = bih_ref[...]                       # f32

    # ---- Hoisted input projection, fused over timestep chunks so each dot
    #      feeds ~512 MXU rows instead of BT; off the serial critical path.
    chunk = max(1, min(T, 512 // BT))
    while T % chunk:
        chunk -= 1
    n_chunks = T // chunk

    def proj_step(c, carry):
        t0 = pl.multiple_of(c * chunk, chunk)
        x_blk = x_ref[pl.ds(t0, chunk)]                        # (chunk, BT, O)
        x2 = x_blk.reshape(chunk * BT, O).astype(jnp.bfloat16)
        gx = jnp.dot(x2, wih, preferred_element_type=jnp.float32) + bih
        gx_ref[pl.ds(t0, chunk)] = gx.reshape(chunk, BT, 3 * Hp)
        return carry

    lax.fori_loop(0, n_chunks, proj_step, 0,
                  unroll=True if n_chunks <= 8 else 4)

    whh = whh_ref[...]                       # bf16
    bhh = bhh_ref[...]                       # f32
    lenm1 = lenm1_ref[...]                   # (BT, 1), hoisted out of the loop

    h0 = jnp.zeros((BT, Hp), jnp.float32)
    gru_unroll = True if T <= 16 else 8      # bound vreg pressure for long T

    # ---- Serial GRU recurrence: one MXU matmul per step, lane-aligned gate
    #      slices, single carry that freezes at t == len-1 (so final h == h_last).
    def gru_step(t, h):
        gx = gx_ref[t]                                           # (BT, 3*Hp) f32
        gh = jnp.dot(h.astype(jnp.bfloat16), whh,
                     preferred_element_type=jnp.float32) + bhh
        # PyTorch GRU gate ordering: reset, update, new (each Hp lanes wide).
        r = jax.nn.sigmoid(gx[:, 0:Hp] + gh[:, 0:Hp])
        z = jax.nn.sigmoid(gx[:, Hp:2 * Hp] + gh[:, Hp:2 * Hp])
        n = jnp.tanh(gx[:, 2 * Hp:3 * Hp] + r * gh[:, 2 * Hp:3 * Hp])
        h_new = n + z * (h - n)              # == (1-z)*n + z*h
        # Latch: once t passes len-1, keep h (padded rows with lenm1=-1 stay 0).
        return jnp.where(t <= lenm1, h_new, h)

    h_last = lax.fori_loop(0, T, gru_step, h0, unroll=gru_unroll)

    # ---- MLP head + additive (-inf) action mask, lane-dense output store.
    hidden = jnp.maximum(
        jnp.dot(h_last.astype(jnp.bfloat16), w1_ref[...],
                preferred_element_type=jnp.float32) + b1_ref[...],
        0.0,
    )
    q = (
        jnp.dot(hidden.astype(jnp.bfloat16), w2_ref[...],
                preferred_element_type=jnp.float32) + b2_ref[...]
    )
    q_ref[...] = q + amask_ref[...]


# -----------------------------------------------------------------------------
# One-time weight packing (hoisted out of the per-call forward path).
# -----------------------------------------------------------------------------
def pack_qnet_params(params):
    wih = np.asarray(params["wih"], np.float32)          # (3H, O)
    whh = np.asarray(params["whh"], np.float32)          # (3H, H)
    H = int(whh.shape[1])
    O = int(wih.shape[1])
    A = int(np.asarray(params["w2"]).shape[0])
    Hp = _round_up(H, LANE)
    Ap = _round_up(A, LANE)

    wih_t, whh_t = wih.T, whh.T
    bih = np.asarray(params["bih"], np.float32)
    bhh = np.asarray(params["bhh"], np.float32)

    wih_p = np.zeros((O, 3 * Hp), np.float32)
    whh_p = np.zeros((Hp, 3 * Hp), np.float32)
    bih_p = np.zeros((1, 3 * Hp), np.float32)
    bhh_p = np.zeros((1, 3 * Hp), np.float32)
    for g in range(3):
        wih_p[:, g * Hp:g * Hp + H] = wih_t[:, g * H:(g + 1) * H]
        whh_p[:H, g * Hp:g * Hp + H] = whh_t[:, g * H:(g + 1) * H]
        bih_p[0, g * Hp:g * Hp + H] = bih[g * H:(g + 1) * H]
        bhh_p[0, g * Hp:g * Hp + H] = bhh[g * H:(g + 1) * H]

    w1_p = np.zeros((Hp, Hp), np.float32)
    w1_p[:H, :H] = np.asarray(params["w1"], np.float32).T
    b1_p = np.zeros((1, Hp), np.float32)
    b1_p[0, :H] = np.asarray(params["b1"], np.float32)
    w2_p = np.zeros((Hp, Ap), np.float32)
    w2_p[:H, :A] = np.asarray(params["w2"], np.float32).T
    b2_p = np.zeros((1, Ap), np.float32)
    b2_p[0, :A] = np.asarray(params["b2"], np.float32)

    return {
        "wih": jnp.asarray(wih_p, jnp.bfloat16),   # bf16 MXU operands
        "bih": jnp.asarray(bih_p),
        "whh": jnp.asarray(whh_p, jnp.bfloat16),
        "bhh": jnp.asarray(bhh_p),
        "w1": jnp.asarray(w1_p, jnp.bfloat16),
        "b1": jnp.asarray(b1_p),
        "w2": jnp.asarray(w2_p, jnp.bfloat16),
        "b2": jnp.asarray(b2_p),
        "dims": (O, H, A, Hp, Ap),
    }


# -----------------------------------------------------------------------------
# Shape-cached pallas_call builder (jit the call path).
# -----------------------------------------------------------------------------
@functools.lru_cache(maxsize=None)
def _build_qnet_call(T, Bp, batch_tile, O, Hp, Ap):
    full = lambda i: (0, 0)
    grid_spec = pltpu.PrefetchScalarGridSpec(
        num_scalar_prefetch=0,
        grid=(Bp // batch_tile,),
        in_specs=[
            pl.BlockSpec((T, batch_tile, O), lambda i: (0, i, 0)),
            pl.BlockSpec((batch_tile, 1), lambda i: (i, 0)),
            pl.BlockSpec((batch_tile, Ap), lambda i: (i, 0)),
            pl.BlockSpec((O, 3 * Hp), full),
            pl.BlockSpec((1, 3 * Hp), full),
            pl.BlockSpec((Hp, 3 * Hp), full),
            pl.BlockSpec((1, 3 * Hp), full),
            pl.BlockSpec((Hp, Hp), full),
            pl.BlockSpec((1, Hp), full),
            pl.BlockSpec((Hp, Ap), full),
            pl.BlockSpec((1, Ap), full),
        ],
        out_specs=pl.BlockSpec((batch_tile, Ap), lambda i: (i, 0)),
        scratch_shapes=[pltpu.VMEM((T, batch_tile, 3 * Hp), jnp.float32)],
    )

    # VMEM budget: double-buffered x block + gx scratch + bf16 weights + out.
    est = (
        2 * T * batch_tile * O * 4
        + T * batch_tile * 3 * Hp * 4
        + (O + Hp) * 3 * Hp * 2 + Hp * Hp * 2 + Hp * Ap * 2
        + 4 * batch_tile * Ap * 4
        + (2 << 20)
    )
    vmem_limit = int(min(120 << 20, max(32 << 20, 2 * est)))
    # TODO(synk): for very long T on v7x (64 MiB VMEM) the gx scratch should be
    # chunked over time (emit_pipeline / pl.ANY + make_async_copy) instead of
    # held resident.

    call = pl.pallas_call(
        qnet_kernel,
        out_shape=jax.ShapeDtypeStruct((Bp, Ap), jnp.float32),
        grid_spec=grid_spec,
        compiler_params=pltpu.CompilerParams(
            dimension_semantics=("parallel",),   # batch tiles shard across TCs
            vmem_limit_bytes=vmem_limit,
        ),
    )
    return jax.jit(call)


# -----------------------------------------------------------------------------
# Forward: per-call pad_sequence equivalent + hardware-tile padding + call.
# -----------------------------------------------------------------------------
def qnet_forward(x_list, action_mask, packed, *, batch_tile=None):
    O, H, A, Hp, Ap = packed["dims"]
    B = len(x_list)
    lengths = np.array([s.shape[0] for s in x_list], dtype=np.int32)
    T = int(lengths.max())

    if batch_tile is None:
        # 128 rows fills the MXU; tiny batches fall back to 8-row tiles.
        batch_tile = min(128, _round_up(B, SUBLANE))
    Bp = _round_up(B, batch_tile)
    # TODO(synk): on v7x keep Bp // batch_tile >= 2 for large B so both
    # TensorCores get work; with a single grid step one TC sits idle.

    # pad_sequence(batch_first=True) -> (B, T, O), then time-major + batch pad.
    x_pad = np.zeros((B, T, O), dtype=np.float32)
    for i, s in enumerate(x_list):
        x_pad[i, : s.shape[0]] = np.asarray(s, dtype=np.float32)
    x_tm = np.zeros((T, Bp, O), dtype=np.float32)
    x_tm[:, :B, :] = x_pad.transpose(1, 0, 2)

    # lengths-1 (hoisted); padded batch rows use -1 -> never latch (stay zero).
    # TODO(synk): zero-length sequences keep h_last = 0, whereas PyTorch
    # indexing at lengths-1 == -1 would wrap to the last timestep.
    lenm1 = np.full((Bp, 1), -1, dtype=np.int32)
    lenm1[:B, 0] = lengths - 1

    # Additive action mask: 0 keeps, -inf masks (masked_fill equivalent).
    amask_add = np.zeros((Bp, Ap), np.float32)
    amask_add[:B, :A] = np.where(
        np.asarray(action_mask, bool), np.float32(-np.inf), np.float32(0.0)
    )

    call = _build_qnet_call(T, Bp, batch_tile, O, Hp, Ap)
    q_full = call(
        jnp.asarray(x_tm), jnp.asarray(lenm1), jnp.asarray(amask_add),
        packed["wih"], packed["bih"], packed["whh"], packed["bhh"],
        packed["w1"], packed["b1"], packed["w2"], packed["b2"],
    )
    return q_full[:B, :A], jnp.asarray(x_pad), jnp.asarray(lengths)


# -----------------------------------------------------------------------------
# Pure-JAX reference (mirrors the PyTorch forward) for correctness check.
# -----------------------------------------------------------------------------
def qnet_ref(x_pad, lengths, action_mask, p):
    B, T, _ = x_pad.shape
    H = p["whh"].shape[1]
    h = jnp.zeros((B, H), jnp.float32)
    hs = []
    for t in range(T):
        x_t = x_pad[:, t, :]
        gx = x_t @ p["wih"].T + p["bih"]
        gh = h @ p["whh"].T + p["bhh"]
        r = jax.nn.sigmoid(gx[:, :H] + gh[:, :H])
        z = jax.nn.sigmoid(gx[:, H:2 * H] + gh[:, H:2 * H])
        n = jnp.tanh(gx[:, 2 * H:] + r * gh[:, 2 * H:])
        h = (1.0 - z) * n + z * h
        hs.append(h)
    hs = jnp.stack(hs, axis=1)                           # (B, T, H)
    mask = (jnp.arange(T)[None, :] < lengths[:, None]).astype(jnp.float32)
    hs = hs * mask[:, :, None]
    h_last = hs[jnp.arange(B), lengths - 1]
    hid = jax.nn.relu(h_last @ p["w1"].T + p["b1"])
    q = hid @ p["w2"].T + p["b2"]
    return jnp.where(action_mask, -jnp.inf, q)


if __name__ == "__main__":
    obs_dim, hidden_dim, action_dim = 4, 32, 4
    B = 2
    seq_lens = [5, 8]                                    # variable-length sequences

    key = jax.random.PRNGKey(0)
    keys = jax.random.split(key, 12)
    scale = 0.1
    params = {
        "wih": scale * jax.random.normal(keys[0], (3 * hidden_dim, obs_dim), jnp.float32),
        "whh": scale * jax.random.normal(keys[1], (3 * hidden_dim, hidden_dim), jnp.float32),
        "bih": scale * jax.random.normal(keys[2], (3 * hidden_dim,), jnp.float32),
        "bhh": scale * jax.random.normal(keys[3], (3 * hidden_dim,), jnp.float32),
        "w1": scale * jax.random.normal(keys[4], (hidden_dim, hidden_dim), jnp.float32),
        "b1": scale * jax.random.normal(keys[5], (hidden_dim,), jnp.float32),
        "w2": scale * jax.random.normal(keys[6], (action_dim, hidden_dim), jnp.float32),
        "b2": scale * jax.random.normal(keys[7], (action_dim,), jnp.float32),
    }

    x_list = [
        jax.random.normal(keys[8 + i], (seq_lens[i], obs_dim), jnp.float32)
        for i in range(B)
    ]
    action_mask = jnp.array([[False, True, False, False],
                             [True, False, False, True]])

    packed = pack_qnet_params(params)                    # one-time weight packing
    q, x_pad, lengths = qnet_forward(x_list, action_mask, packed)
    q = jax.block_until_ready(q)

    q_ref = qnet_ref(x_pad, lengths, action_mask, params)
    # bf16 MXU operands with f32 accumulation -> looser tolerance than pure f32.
    np.testing.assert_allclose(np.asarray(q), np.asarray(q_ref), rtol=1e-2, atol=1e-2)

    print("KERNEL_OK")
</pallas_src>

<mosaic_0001>
module attributes {stable_mosaic.version = 11 : i64} {
  func.func @qnet_kernel(%arg0: i32, %arg1: memref<8x8x4xf32, #tpu.memory_space<vmem>>, %arg2: memref<8x1xi32, #tpu.memory_space<vmem>>, %arg3: memref<8x128xf32, #tpu.memory_space<vmem>>, %arg4: memref<4x384xbf16, #tpu.memory_space<vmem>>, %arg5: memref<1x384xf32, #tpu.memory_space<vmem>>, %arg6: memref<128x384xbf16, #tpu.memory_space<vmem>>, %arg7: memref<1x384xf32, #tpu.memory_space<vmem>>, %arg8: memref<128x128xbf16, #tpu.memory_space<vmem>>, %arg9: memref<1x128xf32, #tpu.memory_space<vmem>>, %arg10: memref<128x128xbf16, #tpu.memory_space<vmem>>, %arg11: memref<1x128xf32, #tpu.memory_space<vmem>>, %arg12: memref<8x128xf32, #tpu.memory_space<vmem>>, %arg13: memref<8x8x384xf32, #tpu.memory_space<vmem>>) attributes {dimension_semantics = [#tpu.dimension_semantics<parallel>], iteration_bounds = array<i64: 1>, scalar_prefetch = 0 : i64, scratch_operands = 1 : i64, tpu.core_type = #tpu.core_type<tc>, window_params = [{transform_indices = @transform_0, window_bounds = array<i64: 8, 8, 4>}, {transform_indices = @transform_1, window_bounds = array<i64: 8, 1>}, {transform_indices = @transform_2, window_bounds = array<i64: 8, 128>}, {pipeline_mode = #tpu.pipeline_mode<synchronous>, transform_indices = @transform_3, window_bounds = array<i64: 4, 384>}, {pipeline_mode = #tpu.pipeline_mode<synchronous>, transform_indices = @transform_4, window_bounds = array<i64: 1, 384>}, {pipeline_mode = #tpu.pipeline_mode<synchronous>, transform_indices = @transform_5, window_bounds = array<i64: 128, 384>}, {pipeline_mode = #tpu.pipeline_mode<synchronous>, transform_indices = @transform_6, window_bounds = array<i64: 1, 384>}, {pipeline_mode = #tpu.pipeline_mode<synchronous>, transform_indices = @transform_7, window_bounds = array<i64: 128, 128>}, {pipeline_mode = #tpu.pipeline_mode<synchronous>, transform_indices = @transform_8, window_bounds = array<i64: 1, 128>}, {pipeline_mode = #tpu.pipeline_mode<synchronous>, transform_indices = @transform_9, window_bounds = array<i64: 128, 128>}, {pipeline_mode = #tpu.pipeline_mode<synchronous>, transform_indices = @transform_10, window_bounds = array<i64: 1, 128>}, {transform_indices = @transform_11, window_bounds = array<i64: 8, 128>}]} {
    %c0 = arith.constant 0 : index
    %c0_0 = arith.constant 0 : index
    %0 = vector.load %arg4[%c0, %c0_0] : memref<4x384xbf16, #tpu.memory_space<vmem>>, vector<4x384xbf16>
    %c0_1 = arith.constant 0 : index
    %c0_2 = arith.constant 0 : index
    %1 = vector.load %arg5[%c0_1, %c0_2] : memref<1x384xf32, #tpu.memory_space<vmem>>, vector<1x384xf32>
    %c0_i32 = arith.constant 0 : i32
    %c8_i32 = arith.constant 8 : i32
    %2 = arith.muli %c0_i32, %c8_i32 : i32
    %3 = tpu.assume_multiple %2, 8 : i32
    %4 = arith.index_cast %3 : i32 to index
    %c0_3 = arith.constant 0 : index
    %c0_4 = arith.constant 0 : index
    %5 = vector.load %arg1[%4, %c0_3, %c0_4] : memref<8x8x4xf32, #tpu.memory_space<vmem>>, vector<8x8x4xf32>
    %6 = vector.shape_cast %5 : vector<8x8x4xf32> to vector<64x4xf32>
    %7 = arith.truncf %6 : vector<64x4xf32> to vector<64x4xbf16>
    %cst = arith.constant dense<0.000000e+00> : vector<64x384xf32>
    %8 = tpu.matmul %7, %0, %cst {dimension_numbers = #tpu.dot_dimension_numbers<[1], [0], [0], [1], [0, 0, 1, 1], [], []>} : vector<64x4xbf16>, vector<4x384xbf16>, vector<64x384xf32> -> vector<64x384xf32>
    %9 = vector.broadcast %1 : vector<1x384xf32> to vector<64x384xf32>
    %10 = arith.addf %8, %9 : vector<64x384xf32>
    %11 = vector.shape_cast %10 : vector<64x384xf32> to vector<8x8x384xf32>
    %12 = arith.index_cast %3 : i32 to index
    %c0_5 = arith.constant 0 : index
    %c0_6 = arith.constant 0 : index
    %13 = vector.load %arg13[%12, %c0_5, %c0_6] : memref<8x8x384xf32, #tpu.memory_space<vmem>>, vector<8x8x384xf32>
    tpu.vector_store %arg13[%12, %c0_5, %c0_6], %11 {strides = array<i32>} : memref<8x8x384xf32, #tpu.memory_space<vmem>>, vector<8x8x384xf32>,
    %c1_i32 = arith.constant 1 : i32
    %c0_7 = arith.constant 0 : index
    %c0_8 = arith.constant 0 : index
    %14 = vector.load %arg6[%c0_7, %c0_8] : memref<128x384xbf16, #tpu.memory_space<vmem>>, vector<128x384xbf16>
    %c0_9 = arith.constant 0 : index
    %c0_10 = arith.constant 0 : index
    %15 = vector.load %arg7[%c0_9, %c0_10] : memref<1x384xf32, #tpu.memory_space<vmem>>, vector<1x384xf32>
    %c0_11 = arith.constant 0 : index
    %c0_12 = arith.constant 0 : index
    %16 = vector.load %arg2[%c0_11, %c0_12] : memref<8x1xi32, #tpu.memory_space<vmem>>, vector<8x1xi32>
    %cst_13 = arith.constant 0.000000e+00 : f32
    %17 = vector.broadcast %cst_13 : f32 to vector<8x128xf32>
    %c0_i32_14 = arith.constant 0 : i32
    %18 = arith.index_cast %c0_i32_14 : i32 to index
    %c0_15 = arith.constant 0 : index
    %c0_16 = arith.constant 0 : index
    %19 = vector.load %arg13[%18, %c0_15, %c0_16] : memref<8x8x384xf32, #tpu.memory_space<vmem>>, vector<1x8x384xf32>
    %20 = vector.shape_cast %19 : vector<1x8x384xf32> to vector<8x384xf32>
    %21 = arith.truncf %17 : vector<8x128xf32> to vector<8x128xbf16>
    %cst_17 = arith.constant dense<0.000000e+00> : vector<8x384xf32>
    %22 = tpu.matmul %21, %14, %cst_17 {dimension_numbers = #tpu.dot_dimension_numbers<[1], [0], [0], [1], [0, 0, 1, 1], [], []>} : vector<8x128xbf16>, vector<128x384xbf16>, vector<8x384xf32> -> vector<8x384xf32>
    %23 = vector.broadcast %15 : vector<1x384xf32> to vector<8x384xf32>
    %24 = arith.addf %22, %23 : vector<8x384xf32>
    %25 = vector.extract_strided_slice %20 {offsets = [0, 0], sizes = [8, 128], strides = [1, 1]} : vector<8x384xf32> to vector<8x128xf32>
    %26 = vector.extract_strided_slice %24 {offsets = [0, 0], sizes = [8, 128], strides = [1, 1]} : vector<8x384xf32> to vector<8x128xf32>
    %27 = arith.addf %25, %26 : vector<8x128xf32>
    %28 = arith.negf %27 : vector<8x128xf32>
    %29 = math.exp %28 : vector<8x128xf32>
    %cst_18 = arith.constant 1.000000e+00 : f32
    %30 = vector.broadcast %cst_18 : f32 to vector<8x128xf32>
    %31 = arith.addf %30, %29 : vector<8x128xf32>
    %32 = arith.divf %30, %31 : vector<8x128xf32>
    %33 = vector.extract_strided_slice %20 {offsets = [0, 128], sizes = [8, 128], strides = [1, 1]} : vector<8x384xf32> to vector<8x128xf32>
    %34 = vector.extract_strided_slice %24 {offsets = [0, 128], sizes = [8, 128], strides = [1, 1]} : vector<8x384xf32> to vector<8x128xf32>
    %35 = arith.addf %33, %34 : vector<8x128xf32>
    %36 = arith.negf %35 : vector<8x128xf32>
    %37 = math.exp %36 : vector<8x128xf32>
    %cst_19 = arith.constant 1.000000e+00 : f32
    %38 = vector.broadcast %cst_19 : f32 to vector<8x128xf32>
    %39 = arith.addf %38, %37 : vector<8x128xf32>
    %40 = arith.divf %38, %39 : vector<8x128xf32>
    %41 = vector.extract_strided_slice %20 {offsets = [0, 256], sizes = [8, 128], strides = [1, 1]} : vector<8x384xf32> to vector<8x128xf32>
    %42 = vector.extract_strided_slice %24 {offsets = [0, 256], sizes = [8, 128], strides = [1, 1]} : vector<8x384xf32> to vector<8x128xf32>
    %43 = arith.mulf %32, %42 : vector<8x128xf32>
    %44 = arith.addf %41, %43 : vector<8x128xf32>
    %45 = math.tanh %44 : vector<8x128xf32>
    %46 = arith.subf %17, %45 : vector<8x128xf32>
    %47 = arith.mulf %40, %46 : vector<8x128xf32>
    %48 = arith.addf %45, %47 : vector<8x128xf32>
    %49 = vector.broadcast %c0_i32_14 : i32 to vector<8x1xi32>
    %50 = arith.cmpi sle, %49, %16 : vector<8x1xi32>
    %51 = vector.shape_cast %50 : vector<8x1xi1> to vector<8x1xi1>
    %52 = vector.broadcast %51 : vector<8x1xi1> to vector<8x128xi1>
    %53 = arith.select %52, %48, %17 : vector<8x128xi1>, vector<8x128xf32>
    %c1_i32_20 = arith.constant 1 : i32
    %54 = arith.index_cast %c1_i32_20 : i32 to index
    %c0_21 = arith.constant 0 : index
    %c0_22 = arith.constant 0 : index
    %55 = vector.load %arg13[%54, %c0_21, %c0_22] : memref<8x8x384xf32, #tpu.memory_space<vmem>>, vector<1x8x384xf32>
    %56 = vector.shape_cast %55 : vector<1x8x384xf32> to vector<8x384xf32>
    %57 = arith.truncf %53 : vector<8x128xf32> to vector<8x128xbf16>
    %cst_23 = arith.constant dense<0.000000e+00> : vector<8x384xf32>
    %58 = tpu.matmul %57, %14, %cst_23 {dimension_numbers = #tpu.dot_dimension_numbers<[1], [0], [0], [1], [0, 0, 1, 1], [], []>} : vector<8x128xbf16>, vector<128x384xbf16>, vector<8x384xf32> -> vector<8x384xf32>
    %59 = vector.broadcast %15 : vector<1x384xf32> to vector<8x384xf32>
    %60 = arith.addf %58, %59 : vector<8x384xf32>
    %61 = vector.extract_strided_slice %56 {offsets = [0, 0], sizes = [8, 128], strides = [1, 1]} : vector<8x384xf32> to vector<8x128xf32>
    %62 = vector.extract_strided_slice %60 {offsets = [0, 0], sizes = [8, 128], strides = [1, 1]} : vector<8x384xf32> to vector<8x128xf32>
    %63 = arith.addf %61, %62 : vector<8x128xf32>
    %64 = arith.negf %63 : vector<8x128xf32>
    %65 = math.exp %64 : vector<8x128xf32>
    %cst_24 = arith.constant 1.000000e+00 : f32
    %66 = vector.broadcast %cst_24 : f32 to vector<8x128xf32>
    %67 = arith.addf %66, %65 : vector<8x128xf32>
    %68 = arith.divf %66, %67 : vector<8x128xf32>
    %69 = vector.extract_strided_slice %56 {offsets = [0, 128], sizes = [8, 128], strides = [1, 1]} : vector<8x384xf32> to vector<8x128xf32>
    %70 = vector.extract_strided_slice %60 {offsets = [0, 128], sizes = [8, 128], strides = [1, 1]} : vector<8x384xf32> to vector<8x128xf32>
    %71 = arith.addf %69, %70 : vector<8x128xf32>
    %72 = arith.negf %71 : vector<8x128xf32>
    %73 = math.exp %72 : vector<8x128xf32>
    %cst_25 = arith.constant 1.000000e+00 : f32
    %74 = vector.broadcast %cst_25 : f32 to vector<8x128xf32>
    %75 = arith.addf %74, %73 : vector<8x128xf32>
    %76 = arith.divf %74, %75 : vector<8x128xf32>
    %77 = vector.extract_strided_slice %56 {offsets = [0, 256], sizes = [8, 128], strides = [1, 1]} : vector<8x384xf32> to vector<8x128xf32>
    %78 = vector.extract_strided_slice %60 {offsets = [0, 256], sizes = [8, 128], strides = [1, 1]} : vector<8x384xf32> to vector<8x128xf32>
    %79 = arith.mulf %68, %78 : vector<8x128xf32>
    %80 = arith.addf %77, %79 : vector<8x128xf32>
    %81 = math.tanh %80 : vector<8x128xf32>
    %82 = arith.subf %53, %81 : vector<8x128xf32>
    %83 = arith.mulf %76, %82 : vector<8x128xf32>
    %84 = arith.addf %81, %83 : vector<8x128xf32>
    %85 = vector.broadcast %c1_i32_20 : i32 to vector<8x1xi32>
    %86 = arith.cmpi sle, %85, %16 : vector<8x1xi32>
    %87 = vector.shape_cast %86 : vector<8x1xi1> to vector<8x1xi1>
    %88 = vector.broadcast %87 : vector<8x1xi1> to vector<8x128xi1>
    %89 = arith.select %88, %84, %53 : vector<8x128xi1>, vector<8x128xf32>
    %c2_i32 = arith.constant 2 : i32
    %90 = arith.index_cast %c2_i32 : i32 to index
    %c0_26 = arith.constant 0 : index
    %c0_27 = arith.constant 0 : index
    %91 = vector.load %arg13[%90, %c0_26, %c0_27] : memref<8x8x384xf32, #tpu.memory_space<vmem>>, vector<1x8x384xf32>
    %92 = vector.shape_cast %91 : vector<1x8x384xf32> to vector<8x384xf32>
    %93 = arith.truncf %89 : vector<8x128xf32> to vector<8x128xbf16>
    %cst_28 = arith.constant dense<0.000000e+00> : vector<8x384xf32>
    %94 = tpu.matmul %93, %14, %cst_28 {dimension_numbers = #tpu.dot_dimension_numbers<[1], [0], [0], [1], [0, 0, 1, 1], [], []>} : vector<8x128xbf16>, vector<128x384xbf16>, vector<8x384xf32> -> vector<8x384xf32>
    %95 = vector.broadcast %15 : vector<1x384xf32> to vector<8x384xf32>
    %96 = arith.addf %94, %95 : vector<8x384xf32>
    %97 = vector.extract_strided_slice %92 {offsets = [0, 0], sizes = [8, 128], strides = [1, 1]} : vector<8x384xf32> to vector<8x128xf32>
    %98 = vector.extract_strided_slice %96 {offsets = [0, 0], sizes = [8, 128], strides = [1, 1]} : vector<8x384xf32> to vector<8x128xf32>
    %99 = arith.addf %97, %98 : vector<8x128xf32>
    %100 = arith.negf %99 : vector<8x128xf32>
    %101 = math.exp %100 : vector<8x128xf32>
    %cst_29 = arith.constant 1.000000e+00 : f32
    %102 = vector.broadcast %cst_29 : f32 to vector<8x128xf32>
    %103 = arith.addf %102, %101 : vector<8x128xf32>
    %104 = arith.divf %102, %103 : vector<8x128xf32>
    %105 = vector.extract_strided_slice %92 {offsets = [0, 128], sizes = [8, 128], strides = [1, 1]} : vector<8x384xf32> to vector<8x128xf32>
    %106 = vector.extract_strided_slice %96 {offsets = [0, 128], sizes = [8, 128], strides = [1, 1]} : vector<8x384xf32> to vector<8x128xf32>
    %107 = arith.addf %105, %106 : vector<8x128xf32>
    %108 = arith.negf %107 : vector<8x128xf32>
    %109 = math.exp %108 : vector<8x128xf32>
    %cst_30 = arith.constant 1.000000e+00 : f32
    %110 = vector.broadcast %cst_30 : f32 to vector<8x128xf32>
    %111 = arith.addf %110, %109 : vector<8x128xf32>
    %112 = arith.divf %110, %111 : vector<8x128xf32>
    %113 = vector.extract_strided_slice %92 {offsets = [0, 256], sizes = [8, 128], strides = [1, 1]} : vector<8x384xf32> to vector<8x128xf32>
    %114 = vector.extract_strided_slice %96 {offsets = [0, 256], sizes = [8, 128], strides = [1, 1]} : vector<8x384xf32> to vector<8x128xf32>
    %115 = arith.mulf %104, %114 : vector<8x128xf32>
    %116 = arith.addf %113, %115 : vector<8x128xf32>
    %117 = math.tanh %116 : vector<8x128xf32>
    %118 = arith.subf %89, %117 : vector<8x128xf32>
    %119 = arith.mulf %112, %118 : vector<8x128xf32>
    %120 = arith.addf %117, %119 : vector<8x128xf32>
    %121 = vector.broadcast %c2_i32 : i32 to vector<8x1xi32>
    %122 = arith.cmpi sle, %121, %16 : vector<8x1xi32>
    %123 = vector.shape_cast %122 : vector<8x1xi1> to vector<8x1xi1>
    %124 = vector.broadcast %123 : vector<8x1xi1> to vector<8x128xi1>
    %125 = arith.select %124, %120, %89 : vector<8x128xi1>, vector<8x128xf32>
    %c3_i32 = arith.constant 3 : i32
    %126 = arith.index_cast %c3_i32 : i32 to index
    %c0_31 = arith.constant 0 : index
    %c0_32 = arith.constant 0 : index
    %127 = vector.load %arg13[%126, %c0_31, %c0_32] : memref<8x8x384xf32, #tpu.memory_space<vmem>>, vector<1x8x384xf32>
    %128 = vector.shape_cast %127 : vector<1x8x384xf32> to vector<8x384xf32>
    %129 = arith.truncf %125 : vector<8x128xf32> to vector<8x128xbf16>
    %cst_33 = arith.constant dense<0.000000e+00> : vector<8x384xf32>
    %130 = tpu.matmul %129, %14, %cst_33 {dimension_numbers = #tpu.dot_dimension_numbers<[1], [0], [0], [1], [0, 0, 1, 1], [], []>} : vector<8x128xbf16>, vector<128x384xbf16>, vector<8x384xf32> -> vector<8x384xf32>
    %131 = vector.broadcast %15 : vector<1x384xf32> to vector<8x384xf32>
    %132 = arith.addf %130, %131 : vector<8x384xf32>
    %133 = vector.extract_strided_slice %128 {offsets = [0, 0], sizes = [8, 128], strides = [1, 1]} : vector<8x384xf32> to vector<8x128xf32>
    %134 = vector.extract_strided_slice %132 {offsets = [0, 0], sizes = [8, 128], strides = [1, 1]} : vector<8x384xf32> to vector<8x128xf32>
    %135 = arith.addf %133, %134 : vector<8x128xf32>
    %136 = arith.negf %135 : vector<8x128xf32>
    %137 = math.exp %136 : vector<8x128xf32>
    %cst_34 = arith.constant 1.000000e+00 : f32
    %138 = vector.broadcast %cst_34 : f32 to vector<8x128xf32>
    %139 = arith.addf %138, %137 : vector<8x128xf32>
    %140 = arith.divf %138, %139 : vector<8x128xf32>
    %141 = vector.extract_strided_slice %128 {offsets = [0, 128], sizes = [8, 128], strides = [1, 1]} : vector<8x384xf32> to vector<8x128xf32>
    %142 = vector.extract_strided_slice %132 {offsets = [0, 128], sizes = [8, 128], strides = [1, 1]} : vector<8x384xf32> to vector<8x128xf32>
    %143 = arith.addf %141, %142 : vector<8x128xf32>
    %144 = arith.negf %143 : vector<8x128xf32>
    %145 = math.exp %144 : vector<8x128xf32>
    %cst_35 = arith.constant 1.000000e+00 : f32
    %146 = vector.broadcast %cst_35 : f32 to vector<8x128xf32>
    %147 = arith.addf %146, %145 : vector<8x128xf32>
    %148 = arith.divf %146, %147 : vector<8x128xf32>
    %149 = vector.extract_strided_slice %128 {offsets = [0, 256], sizes = [8, 128], strides = [1, 1]} : vector<8x384xf32> to vector<8x128xf32>
    %150 = vector.extract_strided_slice %132 {offsets = [0, 256], sizes = [8, 128], strides = [1, 1]} : vector<8x384xf32> to vector<8x128xf32>
    %151 = arith.mulf %140, %150 : vector<8x128xf32>
    %152 = arith.addf %149, %151 : vector<8x128xf32>
    %153 = math.tanh %152 : vector<8x128xf32>
    %154 = arith.subf %125, %153 : vector<8x128xf32>
    %155 = arith.mulf %148, %154 : vector<8x128xf32>
    %156 = arith.addf %153, %155 : vector<8x128xf32>
    %157 = vector.broadcast %c3_i32 : i32 to vector<8x1xi32>
    %158 = arith.cmpi sle, %157, %16 : vector<8x1xi32>
    %159 = vector.shape_cast %158 : vector<8x1xi1> to vector<8x1xi1>
    %160 = vector.broadcast %159 : vector<8x1xi1> to vector<8x128xi1>
    %161 = arith.select %160, %156, %125 : vector<8x128xi1>, vector<8x128xf32>
    %c4_i32 = arith.constant 4 : i32
    %162 = arith.index_cast %c4_i32 : i32 to index
    %c0_36 = arith.constant 0 : index
    %c0_37 = arith.constant 0 : index
    %163 = vector.load %arg13[%162, %c0_36, %c0_37] : memref<8x8x384xf32, #tpu.memory_space<vmem>>, vector<1x8x384xf32>
    %164 = vector.shape_cast %163 : vector<1x8x384xf32> to vector<8x384xf32>
    %165 = arith.truncf %161 : vector<8x128xf32> to vector<8x128xbf16>
    %cst_38 = arith.constant dense<0.000000e+00> : vector<8x384xf32>
    %166 = tpu.matmul %165, %14, %cst_38 {dimension_numbers = #tpu.dot_dimension_numbers<[1], [0], [0], [1], [0, 0, 1, 1], [], []>} : vector<8x128xbf16>, vector<128x384xbf16>, vector<8x384xf32> -> vector<8x384xf32>
    %167 = vector.broadcast %15 : vector<1x384xf32> to vector<8x384xf32>
    %168 = arith.addf %166, %167 : vector<8x384xf32>
    %169 = vector.extract_strided_slice %164 {offsets = [0, 0], sizes = [8, 128], strides = [1, 1]} : vector<8x384xf32> to vector<8x128xf32>
    %170 = vector.extract_strided_slice %168 {offsets = [0, 0], sizes = [8, 128], strides = [1, 1]} : vector<8x384xf32> to vector<8x128xf32>
    %171 = arith.addf %169, %170 : vector<8x128xf32>
    %172 = arith.negf %171 : vector<8x128xf32>
    %173 = math.exp %172 : vector<8x128xf32>
    %cst_39 = arith.constant 1.000000e+00 : f32
    %174 = vector.broadcast %cst_39 : f32 to vector<8x128xf32>
    %175 = arith.addf %174, %173 : vector<8x128xf32>
    %176 = arith.divf %174, %175 : vector<8x128xf32>
    %177 = vector.extract_strided_slice %164 {offsets = [0, 128], sizes = [8, 128], strides = [1, 1]} : vector<8x384xf32> to vector<8x128xf32>
    %178 = vector.extract_strided_slice %168 {offsets = [0, 128], sizes = [8, 128], strides = [1, 1]} : vector<8x384xf32> to vector<8x128xf32>
    %179 = arith.addf %177, %178 : vector<8x128xf32>
    %180 = arith.negf %179 : vector<8x128xf32>
    %181 = math.exp %180 : vector<8x128xf32>
    %cst_40 = arith.constant 1.000000e+00 : f32
    %182 = vector.broadcast %cst_40 : f32 to vector<8x128xf32>
    %183 = arith.addf %182, %181 : vector<8x128xf32>
    %184 = arith.divf %182, %183 : vector<8x128xf32>
    %185 = vector.extract_strided_slice %164 {offsets = [0, 256], sizes = [8, 128], strides = [1, 1]} : vector<8x384xf32> to vector<8x128xf32>
    %186 = vector.extract_strided_slice %168 {offsets = [0, 256], sizes = [8, 128], strides = [1, 1]} : vector<8x384xf32> to vector<8x128xf32>
    %187 = arith.mulf %176, %186 : vector<8x128xf32>
    %188 = arith.addf %185, %187 : vector<8x128xf32>
    %189 = math.tanh %188 : vector<8x128xf32>
    %190 = arith.subf %161, %189 : vector<8x128xf32>
    %191 = arith.mulf %184, %190 : vector<8x128xf32>
    %192 = arith.addf %189, %191 : vector<8x128xf32>
    %193 = vector.broadcast %c4_i32 : i32 to vector<8x1xi32>
    %194 = arith.cmpi sle, %193, %16 : vector<8x1xi32>
    %195 = vector.shape_cast %194 : vector<8x1xi1> to vector<8x1xi1>
    %196 = vector.broadcast %195 : vector<8x1xi1> to vector<8x128xi1>
    %197 = arith.select %196, %192, %161 : vector<8x128xi1>, vector<8x128xf32>
    %c5_i32 = arith.constant 5 : i32
    %198 = arith.index_cast %c5_i32 : i32 to index
    %c0_41 = arith.constant 0 : index
    %c0_42 = arith.constant 0 : index
    %199 = vector.load %arg13[%198, %c0_41, %c0_42] : memref<8x8x384xf32, #tpu.memory_space<vmem>>, vector<1x8x384xf32>
    %200 = vector.shape_cast %199 : vector<1x8x384xf32> to vector<8x384xf32>
    %201 = arith.truncf %197 : vector<8x128xf32> to vector<8x128xbf16>
    %cst_43 = arith.constant dense<0.000000e+00> : vector<8x384xf32>
    %202 = tpu.matmul %201, %14, %cst_43 {dimension_numbers = #tpu.dot_dimension_numbers<[1], [0], [0], [1], [0, 0, 1, 1], [], []>} : vector<8x128xbf16>, vector<128x384xbf16>, vector<8x384xf32> -> vector<8x384xf32>
    %203 = vector.broadcast %15 : vector<1x384xf32> to vector<8x384xf32>
    %204 = arith.addf %202, %203 : vector<8x384xf32>
    %205 = vector.extract_strided_slice %200 {offsets = [0, 0], sizes = [8, 128], strides = [1, 1]} : vector<8x384xf32> to vector<8x128xf32>
    %206 = vector.extract_strided_slice %204 {offsets = [0, 0], sizes = [8, 128], strides = [1, 1]} : vector<8x384xf32> to vector<8x128xf32>
    %207 = arith.addf %205, %206 : vector<8x128xf32>
    %208 = arith.negf %207 : vector<8x128xf32>
    %209 = math.exp %208 : vector<8x128xf32>
    %cst_44 = arith.constant 1.000000e+00 : f32
    %210 = vector.broadcast %cst_44 : f32 to vector<8x128xf32>
    %211 = arith.addf %210, %209 : vector<8x128xf32>
    %212 = arith.divf %210, %211 : vector<8x128xf32>
    %213 = vector.extract_strided_slice %200 {offsets = [0, 128], sizes = [8, 128], strides = [1, 1]} : vector<8x384xf32> to vector<8x128xf32>
    %214 = vector.extract_strided_slice %204 {offsets = [0, 128], sizes = [8, 128], strides = [1, 1]} : vector<8x384xf32> to vector<8x128xf32>
    %215 = arith.addf %213, %214 : vector<8x128xf32>
    %216 = arith.negf %215 : vector<8x128xf32>
    %217 = math.exp %216 : vector<8x128xf32>
    %cst_45 = arith.constant 1.000000e+00 : f32
    %218 = vector.broadcast %cst_45 : f32 to vector<8x128xf32>
    %219 = arith.addf %218, %217 : vector<8x128xf32>
    %220 = arith.divf %218, %219 : vector<8x128xf32>
    %221 = vector.extract_strided_slice %200 {offsets = [0, 256], sizes = [8, 128], strides = [1, 1]} : vector<8x384xf32> to vector<8x128xf32>
    %222 = vector.extract_strided_slice %204 {offsets = [0, 256], sizes = [8, 128], strides = [1, 1]} : vector<8x384xf32> to vector<8x128xf32>
    %223 = arith.mulf %212, %222 : vector<8x128xf32>
    %224 = arith.addf %221, %223 : vector<8x128xf32>
    %225 = math.tanh %224 : vector<8x128xf32>
    %226 = arith.subf %197, %225 : vector<8x128xf32>
    %227 = arith.mulf %220, %226 : vector<8x128xf32>
    %228 = arith.addf %225, %227 : vector<8x128xf32>
    %229 = vector.broadcast %c5_i32 : i32 to vector<8x1xi32>
    %230 = arith.cmpi sle, %229, %16 : vector<8x1xi32>
    %231 = vector.shape_cast %230 : vector<8x1xi1> to vector<8x1xi1>
    %232 = vector.broadcast %231 : vector<8x1xi1> to vector<8x128xi1>
    %233 = arith.select %232, %228, %197 : vector<8x128xi1>, vector<8x128xf32>
    %c6_i32 = arith.constant 6 : i32
    %234 = arith.index_cast %c6_i32 : i32 to index
    %c0_46 = arith.constant 0 : index
    %c0_47 = arith.constant 0 : index
    %235 = vector.load %arg13[%234, %c0_46, %c0_47] : memref<8x8x384xf32, #tpu.memory_space<vmem>>, vector<1x8x384xf32>
    %236 = vector.shape_cast %235 : vector<1x8x384xf32> to vector<8x384xf32>
    %237 = arith.truncf %233 : vector<8x128xf32> to vector<8x128xbf16>
    %cst_48 = arith.constant dense<0.000000e+00> : vector<8x384xf32>
    %238 = tpu.matmul %237, %14, %cst_48 {dimension_numbers = #tpu.dot_dimension_numbers<[1], [0], [0], [1], [0, 0, 1, 1], [], []>} : vector<8x128xbf16>, vector<128x384xbf16>, vector<8x384xf32> -> vector<8x384xf32>
    %239 = vector.broadcast %15 : vector<1x384xf32> to vector<8x384xf32>
    %240 = arith.addf %238, %239 : vector<8x384xf32>
    %241 = vector.extract_strided_slice %236 {offsets = [0, 0], sizes = [8, 128], strides = [1, 1]} : vector<8x384xf32> to vector<8x128xf32>
    %242 = vector.extract_strided_slice %240 {offsets = [0, 0], sizes = [8, 128], strides = [1, 1]} : vector<8x384xf32> to vector<8x128xf32>
    %243 = arith.addf %241, %242 : vector<8x128xf32>
    %244 = arith.negf %243 : vector<8x128xf32>
    %245 = math.exp %244 : vector<8x128xf32>
    %cst_49 = arith.constant 1.000000e+00 : f32
    %246 = vector.broadcast %cst_49 : f32 to vector<8x128xf32>
    %247 = arith.addf %246, %245 : vector<8x128xf32>
    %248 = arith.divf %246, %247 : vector<8x128xf32>
    %249 = vector.extract_strided_slice %236 {offsets = [0, 128], sizes = [8, 128], strides = [1, 1]} : vector<8x384xf32> to vector<8x128xf32>
    %250 = vector.extract_strided_slice %240 {offsets = [0, 128], sizes = [8, 128], strides = [1, 1]} : vector<8x384xf32> to vector<8x128xf32>
    %251 = arith.addf %249, %250 : vector<8x128xf32>
    %252 = arith.negf %251 : vector<8x128xf32>
    %253 = math.exp %252 : vector<8x128xf32>
    %cst_50 = arith.constant 1.000000e+00 : f32
    %254 = vector.broadcast %cst_50 : f32 to vector<8x128xf32>
    %255 = arith.addf %254, %253 : vector<8x128xf32>
    %256 = arith.divf %254, %255 : vector<8x128xf32>
    %257 = vector.extract_strided_slice %236 {offsets = [0, 256], sizes = [8, 128], strides = [1, 1]} : vector<8x384xf32> to vector<8x128xf32>
    %258 = vector.extract_strided_slice %240 {offsets = [0, 256], sizes = [8, 128], strides = [1, 1]} : vector<8x384xf32> to vector<8x128xf32>
    %259 = arith.mulf %248, %258 : vector<8x128xf32>
    %260 = arith.addf %257, %259 : vector<8x128xf32>
    %261 = math.tanh %260 : vector<8x128xf32>
    %262 = arith.subf %233, %261 : vector<8x128xf32>
    %263 = arith.mulf %256, %262 : vector<8x128xf32>
    %264 = arith.addf %261, %263 : vector<8x128xf32>
    %265 = vector.broadcast %c6_i32 : i32 to vector<8x1xi32>
    %266 = arith.cmpi sle, %265, %16 : vector<8x1xi32>
    %267 = vector.shape_cast %266 : vector<8x1xi1> to vector<8x1xi1>
    %268 = vector.broadcast %267 : vector<8x1xi1> to vector<8x128xi1>
    %269 = arith.select %268, %264, %233 : vector<8x128xi1>, vector<8x128xf32>
    %c7_i32 = arith.constant 7 : i32
    %270 = arith.index_cast %c7_i32 : i32 to index
    %c0_51 = arith.constant 0 : index
    %c0_52 = arith.constant 0 : index
    %271 = vector.load %arg13[%270, %c0_51, %c0_52] : memref<8x8x384xf32, #tpu.memory_space<vmem>>, vector<1x8x384xf32>
    %272 = vector.shape_cast %271 : vector<1x8x384xf32> to vector<8x384xf32>
    %273 = arith.truncf %269 : vector<8x128xf32> to vector<8x128xbf16>
    %cst_53 = arith.constant dense<0.000000e+00> : vector<8x384xf32>
    %274 = tpu.matmul %273, %14, %cst_53 {dimension_numbers = #tpu.dot_dimension_numbers<[1], [0], [0], [1], [0, 0, 1, 1], [], []>} : vector<8x128xbf16>, vector<128x384xbf16>, vector<8x384xf32> -> vector<8x384xf32>
    %275 = vector.broadcast %15 : vector<1x384xf32> to vector<8x384xf32>
    %276 = arith.addf %274, %275 : vector<8x384xf32>
    %277 = vector.extract_strided_slice %272 {offsets = [0, 0], sizes = [8, 128], strides = [1, 1]} : vector<8x384xf32> to vector<8x128xf32>
    %278 = vector.extract_strided_slice %276 {offsets = [0, 0], sizes = [8, 128], strides = [1, 1]} : vector<8x384xf32> to vector<8x128xf32>
    %279 = arith.addf %277, %278 : vector<8x128xf32>
    %280 = arith.negf %279 : vector<8x128xf32>
    %281 = math.exp %280 : vector<8x128xf32>
    %cst_54 = arith.constant 1.000000e+00 : f32
    %282 = vector.broadcast %cst_54 : f32 to vector<8x128xf32>
    %283 = arith.addf %282, %281 : vector<8x128xf32>
    %284 = arith.divf %282, %283 : vector<8x128xf32>
    %285 = vector.extract_strided_slice %272 {offsets = [0, 128], sizes = [8, 128], strides = [1, 1]} : vector<8x384xf32> to vector<8x128xf32>
    %286 = vector.extract_strided_slice %276 {offsets = [0, 128], sizes = [8, 128], strides = [1, 1]} : vector<8x384xf32> to vector<8x128xf32>
    %287 = arith.addf %285, %286 : vector<8x128xf32>
    %288 = arith.negf %287 : vector<8x128xf32>
    %289 = math.exp %288 : vector<8x128xf32>
    %cst_55 = arith.constant 1.000000e+00 : f32
    %290 = vector.broadcast %cst_55 : f32 to vector<8x128xf32>
    %291 = arith.addf %290, %289 : vector<8x128xf32>
    %292 = arith.divf %290, %291 : vector<8x128xf32>
    %293 = vector.extract_strided_slice %272 {offsets = [0, 256], sizes = [8, 128], strides = [1, 1]} : vector<8x384xf32> to vector<8x128xf32>
    %294 = vector.extract_strided_slice %276 {offsets = [0, 256], sizes = [8, 128], strides = [1, 1]} : vector<8x384xf32> to vector<8x128xf32>
    %295 = arith.mulf %284, %294 : vector<8x128xf32>
    %296 = arith.addf %293, %295 : vector<8x128xf32>
    %297 = math.tanh %296 : vector<8x128xf32>
    %298 = arith.subf %269, %297 : vector<8x128xf32>
    %299 = arith.mulf %292, %298 : vector<8x128xf32>
    %300 = arith.addf %297, %299 : vector<8x128xf32>
    %301 = vector.broadcast %c7_i32 : i32 to vector<8x1xi32>
    %302 = arith.cmpi sle, %301, %16 : vector<8x1xi32>
    %303 = vector.shape_cast %302 : vector<8x1xi1> to vector<8x1xi1>
    %304 = vector.broadcast %303 : vector<8x1xi1> to vector<8x128xi1>
    %305 = arith.select %304, %300, %269 : vector<8x128xi1>, vector<8x128xf32>
    %c8_i32_56 = arith.constant 8 : i32
    %306 = arith.truncf %305 : vector<8x128xf32> to vector<8x128xbf16>
    %c0_57 = arith.constant 0 : index
    %c0_58 = arith.constant 0 : index
    %307 = vector.load %arg8[%c0_57, %c0_58] : memref<128x128xbf16, #tpu.memory_space<vmem>>, vector<128x128xbf16>
    %cst_59 = arith.constant dense<0.000000e+00> : vector<8x128xf32>
    %308 = tpu.matmul %306, %307, %cst_59 {dimension_numbers = #tpu.dot_dimension_numbers<[1], [0], [0], [1], [0, 0, 1, 1], [], []>} : vector<8x128xbf16>, vector<128x128xbf16>, vector<8x128xf32> -> vector<8x128xf32>
    %c0_60 = arith.constant 0 : index
    %c0_61 = arith.constant 0 : index
    %309 = vector.load %arg9[%c0_60, %c0_61] : memref<1x128xf32, #tpu.memory_space<vmem>>, vector<1x128xf32>
    %310 = vector.broadcast %309 : vector<1x128xf32> to vector<8x128xf32>
    %311 = arith.addf %308, %310 : vector<8x128xf32>
    %cst_62 = arith.constant 0.000000e+00 : f32
    %312 = vector.broadcast %cst_62 : f32 to vector<8x128xf32>
    %313 = arith.maximumf %311, %312 : vector<8x128xf32>
    %314 = arith.truncf %313 : vector<8x128xf32> to vector<8x128xbf16>
    %c0_63 = arith.constant 0 : index
    %c0_64 = arith.constant 0 : index
    %315 = vector.load %arg10[%c0_63, %c0_64] : memref<128x128xbf16, #tpu.memory_space<vmem>>, vector<128x128xbf16>
    %cst_65 = arith.constant dense<0.000000e+00> : vector<8x128xf32>
    %316 = tpu.matmul %314, %315, %cst_65 {dimension_numbers = #tpu.dot_dimension_numbers<[1], [0], [0], [1], [0, 0, 1, 1], [], []>} : vector<8x128xbf16>, vector<128x128xbf16>, vector<8x128xf32> -> vector<8x128xf32>
    %c0_66 = arith.constant 0 : index
    %c0_67 = arith.constant 0 : index
    %317 = vector.load %arg11[%c0_66, %c0_67] : memref<1x128xf32, #tpu.memory_space<vmem>>, vector<1x128xf32>
    %318 = vector.broadcast %317 : vector<1x128xf32> to vector<8x128xf32>
    %319 = arith.addf %316, %318 : vector<8x128xf32>
    %c0_68 = arith.constant 0 : index
    %c0_69 = arith.constant 0 : index
    %320 = vector.load %arg3[%c0_68, %c0_69] : memref<8x128xf32, #tpu.memory_space<vmem>>, vector<8x128xf32>
    %321 = arith.addf %319, %320 : vector<8x128xf32>
    %c0_70 = arith.constant 0 : index
    %c0_71 = arith.constant 0 : index
    %322 = vector.load %arg12[%c0_70, %c0_71] : memref<8x128xf32, #tpu.memory_space<vmem>>, vector<8x128xf32>
    tpu.vector_store %arg12[%c0_70, %c0_71], %321 {strides = array<i32>} : memref<8x128xf32, #tpu.memory_space<vmem>>, vector<8x128xf32>,
    return
  }
  func.func @transform_0(%arg0: i32) -> (i32, i32, i32) {
    %c0_i32 = arith.constant 0 : i32
    %c0_i32_0 = arith.constant 0 : i32
    %c0_i32_1 = arith.constant 0 : i32
    return %c0_i32, %arg0, %c0_i32_0 : i32, i32, i32
  }
  func.func @transform_1(%arg0: i32) -> (i32, i32) {
    %c0_i32 = arith.constant 0 : i32
    %c0_i32_0 = arith.constant 0 : i32
    return %arg0, %c0_i32 : i32, i32
  }
  func.func @transform_2(%arg0: i32) -> (i32, i32) {
    %c0_i32 = arith.constant 0 : i32
    %c0_i32_0 = arith.constant 0 : i32
    return %arg0, %c0_i32 : i32, i32
  }
  func.func @transform_3(%arg0: i32) -> (i32, i32) {
    %c0_i32 = arith.constant 0 : i32
    %c0_i32_0 = arith.constant 0 : i32
    %c0_i32_1 = arith.constant 0 : i32
    return %c0_i32, %c0_i32_0 : i32, i32
  }
  func.func @transform_4(%arg0: i32) -> (i32, i32) {
    %c0_i32 = arith.constant 0 : i32
    %c0_i32_0 = arith.constant 0 : i32
    %c0_i32_1 = arith.constant 0 : i32
    return %c0_i32, %c0_i32_0 : i32, i32
  }
  func.func @transform_5(%arg0: i32) -> (i32, i32) {
    %c0_i32 = arith.constant 0 : i32
    %c0_i32_0 = arith.constant 0 : i32
    %c0_i32_1 = arith.constant 0 : i32
    return %c0_i32, %c0_i32_0 : i32, i32
  }
  func.func @transform_6(%arg0: i32) -> (i32, i32) {
    %c0_i32 = arith.constant 0 : i32
    %c0_i32_0 = arith.constant 0 : i32
    %c0_i32_1 = arith.constant 0 : i32
    return %c0_i32, %c0_i32_0 : i32, i32
  }
  func.func @transform_7(%arg0: i32) -> (i32, i32) {
    %c0_i32 = arith.constant 0 : i32
    %c0_i32_0 = arith.constant 0 : i32
    %c0_i32_1 = arith.constant 0 : i32
    return %c0_i32, %c0_i32_0 : i32, i32
  }
  func.func @transform_8(%arg0: i32) -> (i32, i32) {
    %c0_i32 = arith.constant 0 : i32
    %c0_i32_0 = arith.constant 0 : i32
    %c0_i32_1 = arith.constant 0 : i32
    return %c0_i32, %c0_i32_0 : i32, i32
  }
  func.func @transform_9(%arg0: i32) -> (i32, i32) {
    %c0_i32 = arith.constant 0 : i32
    %c0_i32_0 = arith.constant 0 : i32
    %c0_i32_1 = arith.constant 0 : i32
    return %c0_i32, %c0_i32_0 : i32, i32
  }
  func.func @transform_10(%arg0: i32) -> (i32, i32) {
    %c0_i32 = arith.constant 0 : i32
    %c0_i32_0 = arith.constant 0 : i32
    %c0_i32_1 = arith.constant 0 : i32
    return %c0_i32, %c0_i32_0 : i32, i32
  }
  func.func @transform_11(%arg0: i32) -> (i32, i32) {
    %c0_i32 = arith.constant 0 : i32
    %c0_i32_0 = arith.constant 0 : i32
    return %arg0, %c0_i32 : i32, i32
  }
}

</mosaic_0001>

<llo_original>
// kernel: tpu_custom_call.1
$region0: #{tpu_custom_call.1}
  #allocation0 [shape = 'u32[]', space=smem, size = 0x4, offset = 0x4, fixed_abs, tag = 'smem constant byte address 0x4 - core index']
  #allocation1 [shape = 'u32[144,128]{1,0:T(1,128)}', space=vmem, size = 0x12000, scoped, tag = 'internal scratch']
  #allocation2 [shape = 'f32[8,8,384]{2,1,0:T(8,128)}', space=vmem, size = 0x18000, scoped, tag = 'scratch operand']
  %s0 = inlined_call_operand.vmem [shape: f32[8,8,4], index: 0, kind: input, shape index: {}]
  %s1 = inlined_call_operand.vmem [shape: s32[8,1], index: 1, kind: input, shape index: {}]
  %s2 = inlined_call_operand.hbm [shape: f32[8,128], index: 2, kind: input, shape index: {}]
  %s3 = inlined_call_operand.hbm [shape: bf16[4,384], index: 3, kind: input, shape index: {}]
  %s4 = inlined_call_operand.vmem [shape: f32[1,384], index: 4, kind: input, shape index: {}]
  %s5 = inlined_call_operand.hbm [shape: bf16[128,384], index: 5, kind: input, shape index: {}]
  %s6 = inlined_call_operand.hbm [shape: f32[1,384], index: 6, kind: input, shape index: {}]
  %s7 = inlined_call_operand.vmem [shape: bf16[128,128], index: 7, kind: input, shape index: {}]
  %s8 = inlined_call_operand.vmem [shape: f32[1,128], index: 8, kind: input, shape index: {}]
  %s9 = inlined_call_operand.vmem [shape: bf16[128,128], index: 9, kind: input, shape index: {}]
  %s10 = inlined_call_operand.vmem [shape: f32[1,128], index: 10, kind: input, shape index: {}]
  %s11 = inlined_call_operand.hbm [shape: f32[8,128], index: 11, kind: output, shape index: {}]
  %s12 = sld [smem:[#allocation0]]
  $region70: #{tpu_custom_call.1} parent=0
    _
  %s14 = ssub.s32 1, %s12
  %s15 = scalar_select 0, %s14, %s12
  $region1: #{tpu_custom_call.1} parent=0
    #allocation3 [shape = 'u8[4096]{0}', space=vmem, size = 0x1000, scoped, tag = 'input window, operand 2, single buffered']
    #allocation4 [shape = 's32[1]{0}', space=sflag, size = 0x4, scoped, tag = 'scoped memory for tpu_custom_call.1']
    #allocation5 [shape = 's32[1]{0}', space=sflag, size = 0x4, scoped, tag = 'scoped memory for tpu_custom_call.1']
    #allocation6 [shape = 'u8[3072]{0}', space=vmem, size = 0xc00, scoped, tag = 'input window, operand 3, single buffered']
    #allocation7 [shape = 's32[1]{0}', space=sflag, size = 0x4, scoped, tag = 'scoped memory for tpu_custom_call.1']
    #allocation8 [shape = 'u8[98304]{0}', space=vmem, size = 0x18000, scoped, tag = 'input window, operand 5, single buffered']
    #allocation9 [shape = 'u8[1536]{0}', space=vmem, size = 0x800, scoped, tag = 'input window, operand 6, single buffered']
    #allocation10 [shape = 's32[1]{0}', space=sflag, size = 0x4, scoped, tag = 'scoped memory for tpu_custom_call.1']
    #allocation11 [shape = 'u8[4096]{0}', space=vmem, size = 0x1000, scoped, tag = 'output window, operand 0, single buffered']
    %16 = vsyncpa [#allocation4], 0
    %17 = vsyncpa [#allocation7], 0
    %18 = vsyncpa [#allocation10], 0
    %19 = vsyncpa [#allocation5], 0
    // Predicated region
    $region2: #{tpu_custom_call.1} parent=1 // pred_check
      _
    $region3: #{tpu_custom_call.1} parent=1 // pred_check_branch
      %21 = sbr.rel (0) target = $region5
    $region4: #{tpu_custom_call.1} parent=1 // pred_region
      _
    $region5: #{tpu_custom_call.1} parent=1 // pred_fallthru
      _
    // Predicated region
    $region6: #{tpu_custom_call.1} parent=1 // pred_check
      _
    $region7: #{tpu_custom_call.1} parent=1 // pred_check_branch
      %23 = sbr.rel (0) target = $region9
    $region8: #{tpu_custom_call.1} parent=1 // pred_region
      _
    $region9: #{tpu_custom_call.1} parent=1 // pred_fallthru
      _
    // Predicated region
    $region10: #{tpu_custom_call.1} parent=1 // pred_check
      _
    $region11: #{tpu_custom_call.1} parent=1 // pred_check_branch
      %25 = sbr.rel (0) target = $region13
    $region12: #{tpu_custom_call.1} parent=1 // pred_region
      %s27 = ssub.s32 128, 128
      %28 = vsyncadd [#allocation4], %s27
      %s30 = sshll.u32 [#allocation3], 4
      %s31 = int_to_ptr.vmem [resolvable:$true] %s30
      %33 = dma.hbm_to_vmem [thread:$0]  %s2, 128, %s31, [#allocation4]
    $region13: #{tpu_custom_call.1} parent=1 // pred_fallthru
      _
    // Predicated region
    $region14: #{tpu_custom_call.1} parent=1 // pred_check
      _
    $region15: #{tpu_custom_call.1} parent=1 // pred_check_branch
      %35 = sbr.rel (0) target = $region17
    $region16: #{tpu_custom_call.1} parent=1 // pred_region
      %s37 = ssub.s32 96, 96
      %38 = vsyncadd [#allocation7], %s37
      %s40 = sshll.u32 [#allocation6], 4
      %s41 = int_to_ptr.vmem [resolvable:$true] %s40
      %43 = dma.hbm_to_vmem [thread:$0]  %s3, 96, %s41, [#allocation7]
    $region17: #{tpu_custom_call.1} parent=1 // pred_fallthru
      _
    // Predicated region
    $region18: #{tpu_custom_call.1} parent=1 // pred_check
      _
    $region19: #{tpu_custom_call.1} parent=1 // pred_check_branch
      %45 = sbr.rel (0) target = $region21
    $region20: #{tpu_custom_call.1} parent=1 // pred_region
      _
    $region21: #{tpu_custom_call.1} parent=1 // pred_fallthru
      _
    // Predicated region
    $region22: #{tpu_custom_call.1} parent=1 // pred_check
      _
    $region23: #{tpu_custom_call.1} parent=1 // pred_check_branch
      %47 = sbr.rel (0) target = $region25
    $region24: #{tpu_custom_call.1} parent=1 // pred_region
      %s49 = ssub.s32 3072, 3072
      %50 = vsyncadd [#allocation7], %s49
      %s51 = sshll.u32 [#allocation8], 4
      %s52 = int_to_ptr.vmem [resolvable:$true] %s51
      %57 = dma.hbm_to_vmem [thread:$0]  %s5, 3072, %s52, [#allocation7], 192, 192, 12
    $region25: #{tpu_custom_call.1} parent=1 // pred_fallthru
      _
    // Predicated region
    $region26: #{tpu_custom_call.1} parent=1 // pred_check
      _
    $region27: #{tpu_custom_call.1} parent=1 // pred_check_branch
      %59 = sbr.rel (0) target = $region29
    $region28: #{tpu_custom_call.1} parent=1 // pred_region
      %s61 = ssub.s32 48, 48
      %62 = vsyncadd [#allocation10], %s61
      %s64 = sshll.u32 [#allocation9], 4
      %s65 = int_to_ptr.vmem [resolvable:$true] %s64
      %67 = dma.hbm_to_vmem [thread:$0]  %s6, 48, %s65, [#allocation10]
    $region29: #{tpu_custom_call.1} parent=1 // pred_fallthru
      _
    // Predicated region
    $region30: #{tpu_custom_call.1} parent=1 // pred_check
      _
    $region31: #{tpu_custom_call.1} parent=1 // pred_check_branch
      %69 = sbr.rel (0) target = $region33
    $region32: #{tpu_custom_call.1} parent=1 // pred_region
      _
    $region33: #{tpu_custom_call.1} parent=1 // pred_fallthru
      _
    // Predicated region
    $region34: #{tpu_custom_call.1} parent=1 // pred_check
      _
    $region35: #{tpu_custom_call.1} parent=1 // pred_check_branch
      %71 = sbr.rel (0) target = $region37
    $region36: #{tpu_custom_call.1} parent=1 // pred_region
      _
    $region37: #{tpu_custom_call.1} parent=1 // pred_fallthru
      _
    // Predicated region
    $region38: #{tpu_custom_call.1} parent=1 // pred_check
      _
    $region39: #{tpu_custom_call.1} parent=1 // pred_check_branch
      %73 = sbr.rel (0) target = $region41
    $region40: #{tpu_custom_call.1} parent=1 // pred_region
      _
    $region41: #{tpu_custom_call.1} parent=1 // pred_fallthru
      _
    // Predicated region
    $region42: #{tpu_custom_call.1} parent=1 // pred_check
      _
    $region43: #{tpu_custom_call.1} parent=1 // pred_check_branch
      %75 = sbr.rel (0) target = $region45
    $region44: #{tpu_custom_call.1} parent=1 // pred_region
      _
    $region45: #{tpu_custom_call.1} parent=1 // pred_fallthru
      _
    // Predicated region
    $region46: #{tpu_custom_call.1} parent=1 // pred_check
      _
    $region47: #{tpu_custom_call.1} parent=1 // pred_check_branch
      %77 = sbr.rel (0) target = $region49
    $region48: #{tpu_custom_call.1} parent=1 // pred_region
      %78 = dma.done [#allocation4], 128
    $region49: #{tpu_custom_call.1} parent=1 // pred_fallthru
      _
    // Predicated region
    $region50: #{tpu_custom_call.1} parent=1 // pred_check
      _
    $region51: #{tpu_custom_call.1} parent=1 // pred_check_branch
      %80 = sbr.rel (0) target = $region53
    $region52: #{tpu_custom_call.1} parent=1 // pred_region
      %81 = dma.done [#allocation7], 96
    $region53: #{tpu_custom_call.1} parent=1 // pred_fallthru
      _
    // Predicated region
    $region54: #{tpu_custom_call.1} parent=1 // pred_check
      _
    $region55: #{tpu_custom_call.1} parent=1 // pred_check_branch
      %83 = sbr.rel (0) target = $region57
    $region56: #{tpu_custom_call.1} parent=1 // pred_region
      %84 = dma.done [#allocation7], 3072
    $region57: #{tpu_custom_call.1} parent=1 // pred_fallthru
      _
    // Predicated region
    $region58: #{tpu_custom_call.1} parent=1 // pred_check
      _
    $region59: #{tpu_custom_call.1} parent=1 // pred_check_branch
      %86 = sbr.rel (0) target = $region61
    $region60: #{tpu_custom_call.1} parent=1 // pred_region
      %87 = dma.done [#allocation10], 48
    $region61: #{tpu_custom_call.1} parent=1 // pred_fallthru
      _
    %v89 = vld [vmem:[#allocation6] sm:$0x3f]
    %v90 = vld [vmem:[%s4] sm:$0x7]
    %s91 = smul.u32 0, 8
    %s92 = scalar_lea.vmem %s0, %s91
    %v93 = vld [vmem:[%s92] sm:$0xff]
    %v94 = vld [vmem:[%s92 + $0x8] sm:$0xff]
    %v95 = vld [vmem:[%s92 + $0x10] sm:$0xff]
    %v96 = vld [vmem:[%s92 + $0x18] sm:$0xff]
    %v97 = vld [vmem:[%s92 + $0x20] sm:$0xff]
    %v98 = vld [vmem:[%s92 + $0x28] sm:$0xff]
    %v99 = vld [vmem:[%s92 + $0x30] sm:$0xff]
    %v100 = vld [vmem:[%s92 + $0x38] sm:$0xff]
    %v101 = vpack.c.bf16 %v94, %v93
    %v102 = vpack.c.bf16 %v96, %v95
    %v103 = vpack.c.bf16 %v98, %v97
    %v104 = vpack.c.bf16 %v100, %v99
    %v106 = vlaneseq
    %v107 = vshrl.u32 %v106, 7
    %v108 = vsub.s32 0, %v107
    %v109 = vrot.slane %v90, %v108
    %v110 = vlaneseq
    %v111 = vshrl.u32 %v110, 7
    %v112 = vsub.s32 1, %v111
    %v113 = vrot.slane %v90, %v112
    %v114 = vlaneseq
    %v115 = vshrl.u32 %v114, 7
    %v116 = vsub.s32 2, %v115
    %v117 = vrot.slane %v90, %v116
    %v122 = vcombine.high %v89, %v89
    %v124 = vunpack.c.l.s4 1983009808
    %v125 = vunpack.c.0.s8 %v124
    %v126 = vlaneseq
    %v127 = vshrl.u32 %v126, 7
    %v128 = vsub.s32 %v125, %v127
    %v129 = vrot.slane %v89, %v128
    %v131 = vunpack.c.l.s4 1983009808
    %v132 = vunpack.c.0.s8 %v131
    %v133 = vlaneseq
    %v134 = vshrl.u32 %v133, 7
    %v135 = vsub.s32 %v132, %v134
    %v136 = vrot.slane %v122, %v135
    %v137 = vcombine.high %v129, %v129
    %vm138 = vcmask 31744
    %v140 = vsel %vm138, %v101, 0
    %v143 = vsel %vm138, %v102, 0
    %v146 = vsel %vm138, %v103, 0
    %v149 = vsel %vm138, %v104, 0
    %vm151 = vcmask 1041408
    %v153 = vsel %vm151, %v129, 0
    %v156 = vsel %vm151, %v137, 0
    %v159 = vsel %vm151, %v136, 0
    %161 = vmatprep.subr.bf16.mxu0 %v156
    %162 = vmatpush1.bf16.msra.mxu0 %v153
    %163 = vmatprep.subr.bf16.mxu0 0
    %164 = vmatpush1.bf16.msra.mxu0 0
    %165 = vmatprep.subr.bf16.mxu0 0
    %166 = vmatpush1.bf16.msra.mxu0 0
    %167 = vmatprep.subr.bf16.mxu0 0
    %168 = vmatpush1.bf16.msra.mxu0 0
    %169 = vmatprep.subr.bf16.mxu0 0
    %170 = vmatpush1.bf16.msra.mxu0 0
    %171 = vmatprep.subr.bf16.mxu0 0
    %172 = vmatpush1.bf16.msra.mxu0 0
    %173 = vmatprep.subr.bf16.mxu0 0
    %174 = vmatpush1.bf16.msra.mxu0 0
    %175 = vmatprep.subr.bf16.mxu0 0
    %176 = vmatpush1.bf16.msra.mxu0 0
    %177 = vmatprep.subr.bf16.mxu0 0
    %178 = vmatpush1.bf16.msra.mxu0 0
    %179 = vmatprep.subr.bf16.mxu0 0
    %180 = vmatpush1.bf16.msra.mxu0 0
    %181 = vmatprep.subr.bf16.mxu0 0
    %182 = vmatpush1.bf16.msra.mxu0 0
    %183 = vmatprep.subr.bf16.mxu0 0
    %184 = vmatpush1.bf16.msra.mxu0 0
    %185 = vmatprep.subr.bf16.mxu0 0
    %186 = vmatpush1.bf16.msra.mxu0 0
    %187 = vmatprep.subr.bf16.mxu0 0
    %188 = vmatpush1.bf16.msra.mxu0 0
    %189 = vmatprep.subr.bf16.mxu0 0
    %190 = vmatpush1.bf16.msra.mxu0 0
    %191 = vmatprep.subr.bf16.mxu0 0
    %192 = vmatpush1.bf16.msra.mxu0 0
    %193 = vmatprep.mubr.bf16.mxu0 0
    %194 = vmatmul.mubr.bf16.gmra.mrb[0].mxu0 %v140
    %v195 = vpop.f32.mrb[0].mxu0
    %v196 = vadd.f32 %v109, %v195
    %v197 = vpop.f32.mrb[0].mxu0
    %v198 = vadd.f32 %v113, %v197
    %v199 = vpop.f32.mrb[0].mxu0
    %v200 = vadd.f32 %v109, %v199
    %v201 = vpop.f32.mrb[0].mxu0
    %v202 = vadd.f32 %v113, %v201
    %203 = vmatprep.mubr.bf16.mxu0 0
    %204 = vmatmul.mubr.bf16.gmra.mrb[0].mxu0 %v143
    %v205 = vpop.f32.mrb[0].mxu0
    %v206 = vadd.f32 %v109, %v205
    %v207 = vpop.f32.mrb[0].mxu0
    %v208 = vadd.f32 %v113, %v207
    %v209 = vpop.f32.mrb[0].mxu0
    %v210 = vadd.f32 %v109, %v209
    %v211 = vpop.f32.mrb[0].mxu0
    %v212 = vadd.f32 %v113, %v211
    %213 = vmatprep.mubr.bf16.mxu0 0
    %214 = vmatmul.mubr.bf16.gmra.mrb[0].mxu0 %v146
    %v215 = vpop.f32.mrb[0].mxu0
    %v216 = vadd.f32 %v109, %v215
    %v217 = vpop.f32.mrb[0].mxu0
    %v218 = vadd.f32 %v113, %v217
    %v219 = vpop.f32.mrb[0].mxu0
    %v220 = vadd.f32 %v109, %v219
    %v221 = vpop.f32.mrb[0].mxu0
    %v222 = vadd.f32 %v113, %v221
    %223 = vmatprep.mubr.bf16.mxu0 0
    %224 = vmatmul.mubr.bf16.gmra.mrb[0].mxu0 %v149
    %v225 = vpop.f32.mrb[0].mxu0
    %v226 = vadd.f32 %v109, %v225
    %v227 = vpop.f32.mrb[0].mxu0
    %v228 = vadd.f32 %v113, %v227
    %v229 = vpop.f32.mrb[0].mxu0
    %v230 = vadd.f32 %v109, %v229
    %v231 = vpop.f32.mrb[0].mxu0
    %v232 = vadd.f32 %v113, %v231
    %233 = vdwg.mxu0
    %234 = vmatprep.subr.bf16.mxu0 0
    %235 = vmatpush1.bf16.msra.mxu0 %v159
    %236 = vmatprep.subr.bf16.mxu0 0
    %237 = vmatpush1.bf16.msra.mxu0 0
    %238 = vmatprep.subr.bf16.mxu0 0
    %239 = vmatpush1.bf16.msra.mxu0 0
    %240 = vmatprep.subr.bf16.mxu0 0
    %241 = vmatpush1.bf16.msra.mxu0 0
    %242 = vmatprep.subr.bf16.mxu0 0
    %243 = vmatpush1.bf16.msra.mxu0 0
    %244 = vmatprep.subr.bf16.mxu0 0
    %245 = vmatpush1.bf16.msra.mxu0 0
    %246 = vmatprep.subr.bf16.mxu0 0
    %247 = vmatpush1.bf16.msra.mxu0 0
    %248 = vmatprep.subr.bf16.mxu0 0
    %249 = vmatpush1.bf16.msra.mxu0 0
    %250 = vmatprep.subr.bf16.mxu0 0
    %251 = vmatpush1.bf16.msra.mxu0 0
    %252 = vmatprep.subr.bf16.mxu0 0
    %253 = vmatpush1.bf16.msra.mxu0 0
    %254 = vmatprep.subr.bf16.mxu0 0
    %255 = vmatpush1.bf16.msra.mxu0 0
    %256 = vmatprep.subr.bf16.mxu0 0
    %257 = vmatpush1.bf16.msra.mxu0 0
    %258 = vmatprep.subr.bf16.mxu0 0
    %259 = vmatpush1.bf16.msra.mxu0 0
    %260 = vmatprep.subr.bf16.mxu0 0
    %261 = vmatpush1.bf16.msra.mxu0 0
    %262 = vmatprep.subr.bf16.mxu0 0
    %263 = vmatpush1.bf16.msra.mxu0 0
    %264 = vmatprep.subr.bf16.mxu0 0
    %265 = vmatpush1.bf16.msra.mxu0 0
    %266 = vmatprep.mubr.bf16.mxu0 0
    %267 = vmatmul.mubr.bf16.gmra.mrb[0].mxu0 %v140
    %v268 = vpop.f32.mrb[0].mxu0
    %v269 = vadd.f32 %v117, %v268
    %v270 = vpop.f32.mrb[0].mxu0
    %v271 = vpop.f32.mrb[0].mxu0
    %v272 = vadd.f32 %v117, %v271
    %v273 = vpop.f32.mrb[0].mxu0
    %274 = vmatprep.mubr.bf16.mxu0 0
    %275 = vmatmul.mubr.bf16.gmra.mrb[0].mxu0 %v143
    %v276 = vpop.f32.mrb[0].mxu0
    %v277 = vadd.f32 %v117, %v276
    %v278 = vpop.f32.mrb[0].mxu0
    %v279 = vpop.f32.mrb[0].mxu0
    %v280 = vadd.f32 %v117, %v279
    %v281 = vpop.f32.mrb[0].mxu0
    %282 = vmatprep.mubr.bf16.mxu0 0
    %283 = vmatmul.mubr.bf16.gmra.mrb[0].mxu0 %v146
    %v284 = vpop.f32.mrb[0].mxu0
    %v285 = vadd.f32 %v117, %v284
    %v286 = vpop.f32.mrb[0].mxu0
    %v287 = vpop.f32.mrb[0].mxu0
    %v288 = vadd.f32 %v117, %v287
    %v289 = vpop.f32.mrb[0].mxu0
    %290 = vmatprep.mubr.bf16.mxu0 0
    %291 = vmatmul.mubr.bf16.gmra.mrb[0].mxu0 %v149
    %v292 = vpop.f32.mrb[0].mxu0
    %v293 = vadd.f32 %v117, %v292
    %v294 = vpop.f32.mrb[0].mxu0
    %v295 = vpop.f32.mrb[0].mxu0
    %v296 = vadd.f32 %v117, %v295
    %v297 = vpop.f32.mrb[0].mxu0
    %298 = vdwg.mxu0
    %s299 = smul.u32 0, 3
    %s300 = smul.addr %s299, 8
    %s301 = scalar_lea.vmem [#allocation2], %s300
    %302 = vst [vmem:[%s301] sm:$0xff] %v196
    %303 = vst [vmem:[%s301 + $0x8] sm:$0xff] %v198
    %304 = vst [vmem:[%s301 + $0x10] sm:$0xff] %v269
    %305 = vst [vmem:[%s301 + $0x18] sm:$0xff] %v200
    %306 = vst [vmem:[%s301 + $0x20] sm:$0xff] %v202
    %307 = vst [vmem:[%s301 + $0x28] sm:$0xff] %v272
    %308 = vst [vmem:[%s301 + $0x30] sm:$0xff] %v206
    %309 = vst [vmem:[%s301 + $0x38] sm:$0xff] %v208
    %310 = vst [vmem:[%s301 + $0x40] sm:$0xff] %v277
    %311 = vst [vmem:[%s301 + $0x48] sm:$0xff] %v210
    %312 = vst [vmem:[%s301 + $0x50] sm:$0xff] %v212
    %313 = vst [vmem:[%s301 + $0x58] sm:$0xff] %v280
    %314 = vst [vmem:[%s301 + $0x60] sm:$0xff] %v216
    %315 = vst [vmem:[%s301 + $0x68] sm:$0xff] %v218
    %316 = vst [vmem:[%s301 + $0x70] sm:$0xff] %v285
    %317 = vst [vmem:[%s301 + $0x78] sm:$0xff] %v220
    %318 = vst [vmem:[%s301 + $0x80] sm:$0xff] %v222
    %319 = vst [vmem:[%s301 + $0x88] sm:$0xff] %v288
    %320 = vst [vmem:[%s301 + $0x90] sm:$0xff] %v226
    %321 = vst [vmem:[%s301 + $0x98] sm:$0xff] %v228
    %322 = vst [vmem:[%s301 + $0xa0] sm:$0xff] %v293
    %323 = vst [vmem:[%s301 + $0xa8] sm:$0xff] %v230
    %324 = vst [vmem:[%s301 + $0xb0] sm:$0xff] %v232
    %325 = vst [vmem:[%s301 + $0xb8] sm:$0xff] %v296
    %v326 = vld [vmem:[#allocation8] sm:$0xff]
    %v327 = vld [vmem:[#allocation8 + $0x8] sm:$0xf]
    %v328 = vld [vmem:[#allocation8 + $0xc] sm:$0xff]
    %v329 = vld [vmem:[#allocation8 + $0x14] sm:$0xf]
    %v330 = vld [vmem:[#allocation8 + $0x18] sm:$0xff]
    %v331 = vld [vmem:[#allocation8 + $0x20] sm:$0xf]
    %v332 = vld [vmem:[#allocation8 + $0x24] sm:$0xff]
    %v333 = vld [vmem:[#allocation8 + $0x2c] sm:$0xf]
    %v334 = vld [vmem:[#allocation8 + $0x30] sm:$0xff]
    %v335 = vld [vmem:[#allocation8 + $0x38] sm:$0xf]
    %v336 = vld [vmem:[#allocation8 + $0x3c] sm:$0xff]
    %v337 = vld [vmem:[#allocation8 + $0x44] sm:$0xf]
    %v338 = vld [vmem:[#allocation8 + $0x48] sm:$0xff]
    %v339 = vld [vmem:[#allocation8 + $0x50] sm:$0xf]
    %v340 = vld [vmem:[#allocation8 + $0x54] sm:$0xff]
    %v341 = vld [vmem:[#allocation8 + $0x5c] sm:$0xf]
    %v342 = vld [vmem:[#allocation8 + $0x60] sm:$0xff]
    %v343 = vld [vmem:[#allocation8 + $0x68] sm:$0xf]
    %v344 = vld [vmem:[#allocation8 + $0x6c] sm:$0xff]
    %v345 = vld [vmem:[#allocation8 + $0x74] sm:$0xf]
    %v346 = vld [vmem:[#allocation8 + $0x78] sm:$0xff]
    %v347 = vld [vmem:[#allocation8 + $0x80] sm:$0xf]
    %v348 = vld [vmem:[#allocation8 + $0x84] sm:$0xff]
    %v349 = vld [vmem:[#allocation8 + $0x8c] sm:$0xf]
    %v350 = vld [vmem:[#allocation8 + $0x90] sm:$0xff]
    %v351 = vld [vmem:[#allocation8 + $0x98] sm:$0xf]
    %v352 = vld [vmem:[#allocation8 + $0x9c] sm:$0xff]
    %v353 = vld [vmem:[#allocation8 + $0xa4] sm:$0xf]
    %v354 = vld [vmem:[#allocation8 + $0xa8] sm:$0xff]
    %v355 = vld [vmem:[#allocation8 + $0xb0] sm:$0xf]
    %v356 = vld [vmem:[#allocation8 + $0xb4] sm:$0xff]
    %v357 = vld [vmem:[#allocation8 + $0xbc] sm:$0xf]
    %v358 = vld [vmem:[#allocation9] sm:$0x7]
    %v359 = vld [vmem:[%s1] sm:$0xff]
    %v360 = vld [vmem:[#allocation2] sm:$0xff]
    %v361 = vld [vmem:[#allocation2 + $0x8] sm:$0xff]
    %v362 = vld [vmem:[#allocation2 + $0x10] sm:$0xff]
    %v364 = vlaneseq
    %v365 = vshrl.u32 %v364, 7
    %v366 = vsub.s32 0, %v365
    %v367 = vrot.slane %v358, %v366
    %v368 = vlaneseq
    %v369 = vshrl.u32 %v368, 7
    %v370 = vsub.s32 1, %v369
    %v371 = vrot.slane %v358, %v370
    %v372 = vlaneseq
    %v373 = vshrl.u32 %v372, 7
    %v374 = vsub.s32 2, %v373
    %v375 = vrot.slane %v358, %v374
    %v411 = vunpack.c.l.b16 %v326
    %v412 = vunpack.c.h.b16 %v326
    %v413 = vunpack.c.l.b16 %v327
    %v414 = vunpack.c.l.b16 %v328
    %v415 = vunpack.c.h.b16 %v328
    %v416 = vunpack.c.l.b16 %v329
    %v417 = vunpack.c.l.b16 %v330
    %v418 = vunpack.c.h.b16 %v330
    %v419 = vunpack.c.l.b16 %v331
    %v420 = vunpack.c.l.b16 %v332
    %v421 = vunpack.c.h.b16 %v332
    %v422 = vunpack.c.l.b16 %v333
    %v423 = vunpack.c.l.b16 %v334
    %v424 = vunpack.c.h.b16 %v334
    %v425 = vunpack.c.l.b16 %v335
    %v426 = vunpack.c.l.b16 %v336
    %v427 = vunpack.c.h.b16 %v336
    %v428 = vunpack.c.l.b16 %v337
    %v429 = vunpack.c.l.b16 %v338
    %v430 = vunpack.c.h.b16 %v338
    %v431 = vunpack.c.l.b16 %v339
    %v432 = vunpack.c.l.b16 %v340
    %v433 = vunpack.c.h.b16 %v340
    %v434 = vunpack.c.l.b16 %v341
    %v435 = vunpack.c.l.b16 %v342
    %v436 = vunpack.c.h.b16 %v342
    %v437 = vunpack.c.l.b16 %v343
    %v438 = vunpack.c.l.b16 %v344
    %v439 = vunpack.c.h.b16 %v344
    %v440 = vunpack.c.l.b16 %v345
    %v441 = vunpack.c.l.b16 %v346
    %v442 = vunpack.c.h.b16 %v346
    %v443 = vunpack.c.l.b16 %v347
    %v444 = vunpack.c.l.b16 %v348
    %v445 = vunpack.c.h.b16 %v348
    %v446 = vunpack.c.l.b16 %v349
    %v447 = vunpack.c.l.b16 %v350
    %v448 = vunpack.c.h.b16 %v350
    %v449 = vunpack.c.l.b16 %v351
    %v450 = vunpack.c.l.b16 %v352
    %v451 = vunpack.c.h.b16 %v352
    %v452 = vunpack.c.l.b16 %v353
    %v453 = vunpack.c.l.b16 %v354
    %v454 = vunpack.c.h.b16 %v354
    %v455 = vunpack.c.l.b16 %v355
    %v456 = vunpack.c.l.b16 %v356
    %v457 = vunpack.c.h.b16 %v356
    %v458 = vunpack.c.l.b16 %v357
    %v459 = vpack.c.b16 %v414, %v411
    %v460 = vpack.c.b16 %v415, %v412
    %v461 = vpack.c.b16 %v416, %v413
    %v462 = vpack.c.b16 %v420, %v417
    %v463 = vpack.c.b16 %v421, %v418
    %v464 = vpack.c.b16 %v422, %v419
    %v465 = vpack.c.b16 %v426, %v423
    %v466 = vpack.c.b16 %v427, %v424
    %v467 = vpack.c.b16 %v428, %v425
    %v468 = vpack.c.b16 %v432, %v429
    %v469 = vpack.c.b16 %v433, %v430
    %v470 = vpack.c.b16 %v434, %v431
    %v471 = vpack.c.b16 %v438, %v435
    %v472 = vpack.c.b16 %v439, %v436
    %v473 = vpack.c.b16 %v440, %v437
    %v474 = vpack.c.b16 %v444, %v441
    %v475 = vpack.c.b16 %v445, %v442
    %v476 = vpack.c.b16 %v446, %v443
    %v477 = vpack.c.b16 %v450, %v447
    %v478 = vpack.c.b16 %v451, %v448
    %v479 = vpack.c.b16 %v452, %v449
    %v480 = vpack.c.b16 %v456, %v453
    %v481 = vpack.c.b16 %v457, %v454
    %v482 = vpack.c.b16 %v458, %v455
    %507 = vmatprep.subr.bf16.mxu0 %v460
    %508 = vmatpush1.bf16.msra.mxu0 %v459
    %509 = vmatprep.subr.bf16.mxu0 %v463
    %510 = vmatpush1.bf16.msra.mxu0 %v462
    %511 = vmatprep.subr.bf16.mxu0 %v466
    %512 = vmatpush1.bf16.msra.mxu0 %v465
    %513 = vmatprep.subr.bf16.mxu0 %v469
    %514 = vmatpush1.bf16.msra.mxu0 %v468
    %515 = vmatprep.subr.bf16.mxu0 %v472
    %516 = vmatpush1.bf16.msra.mxu0 %v471
    %517 = vmatprep.subr.bf16.mxu0 %v475
    %518 = vmatpush1.bf16.msra.mxu0 %v474
    %519 = vmatprep.subr.bf16.mxu0 %v478
    %520 = vmatpush1.bf16.msra.mxu0 %v477
    %521 = vmatprep.subr.bf16.mxu0 %v481
    %522 = vmatpush1.bf16.msra.mxu0 %v480
    %523 = vmatprep.subr.bf16.mxu0 0
    %524 = vmatpush1.bf16.msra.mxu0 0
    %525 = vmatprep.subr.bf16.mxu0 0
    %526 = vmatpush1.bf16.msra.mxu0 0
    %527 = vmatprep.subr.bf16.mxu0 0
    %528 = vmatpush1.bf16.msra.mxu0 0
    %529 = vmatprep.subr.bf16.mxu0 0
    %530 = vmatpush1.bf16.msra.mxu0 0
    %531 = vmatprep.subr.bf16.mxu0 0
    %532 = vmatpush1.bf16.msra.mxu0 0
    %533 = vmatprep.subr.bf16.mxu0 0
    %534 = vmatpush1.bf16.msra.mxu0 0
    %535 = vmatprep.subr.bf16.mxu0 0
    %536 = vmatpush1.bf16.msra.mxu0 0
    %537 = vmatprep.subr.bf16.mxu0 0
    %538 = vmatpush1.bf16.msra.mxu0 0
    %539 = vmatprep.mubr.bf16.mxu0 0
    %540 = vmatmul.mubr.bf16.gmra.mrb[0].mxu0 0
    %v541 = vpop.f32.mrb[0].mxu0
    %v542 = vadd.f32 %v367, %v541
    %v543 = vpop.f32.mrb[0].mxu0
    %v544 = vadd.f32 %v371, %v543
    %v545 = vpop.f32.mrb[0].mxu0
    %v546 = vpop.f32.mrb[0].mxu0
    %547 = vdwg.mxu0
    %548 = vmatprep.subr.bf16.mxu0 0
    %549 = vmatpush1.bf16.msra.mxu0 %v461
    %550 = vmatprep.subr.bf16.mxu0 0
    %551 = vmatpush1.bf16.msra.mxu0 %v464
    %552 = vmatprep.subr.bf16.mxu0 0
    %553 = vmatpush1.bf16.msra.mxu0 %v467
    %554 = vmatprep.subr.bf16.mxu0 0
    %555 = vmatpush1.bf16.msra.mxu0 %v470
    %556 = vmatprep.subr.bf16.mxu0 0
    %557 = vmatpush1.bf16.msra.mxu0 %v473
    %558 = vmatprep.subr.bf16.mxu0 0
    %559 = vmatpush1.bf16.msra.mxu0 %v476
    %560 = vmatprep.subr.bf16.mxu0 0
    %561 = vmatpush1.bf16.msra.mxu0 %v479
    %562 = vmatprep.subr.bf16.mxu0 0
    %563 = vmatpush1.bf16.msra.mxu0 %v482
    %564 = vmatprep.subr.bf16.mxu0 0
    %565 = vmatpush1.bf16.msra.mxu0 0
    %566 = vmatprep.subr.bf16.mxu0 0
    %567 = vmatpush1.bf16.msra.mxu0 0
    %568 = vmatprep.subr.bf16.mxu0 0
    %569 = vmatpush1.bf16.msra.mxu0 0
    %570 = vmatprep.subr.bf16.mxu0 0
    %571 = vmatpush1.bf16.msra.mxu0 0
    %572 = vmatprep.subr.bf16.mxu0 0
    %573 = vmatpush1.bf16.msra.mxu0 0
    %574 = vmatprep.subr.bf16.mxu0 0
    %575 = vmatpush1.bf16.msra.mxu0 0
    %576 = vmatprep.subr.bf16.mxu0 0
    %577 = vmatpush1.bf16.msra.mxu0 0
    %578 = vmatprep.subr.bf16.mxu0 0
    %579 = vmatpush1.bf16.msra.mxu0 0
    %580 = vmatprep.mubr.bf16.mxu0 0
    %581 = vmatmul.mubr.bf16.gmra.mrb[0].mxu0 0
    %v582 = vpop.f32.mrb[0].mxu0
    %v583 = vadd.f32 %v375, %v582
    %v584 = vpop.f32.mrb[0].mxu0
    %v585 = vpop.f32.mrb[0].mxu0
    %v586 = vpop.f32.mrb[0].mxu0
    %587 = vdwg.mxu0
    %v588 = vadd.f32 %v360, %v542
    %v589 = vxor.u32 %v588, 2147483648
    %v590 = vmul.f32 %v589, 1.442695
    %v591 = vpow.pop %v590
    %v592 = vadd.f32 %v591, 1.0
    %v593 = vrcp.pop %v592
    %v594 = vmul.f32 1.0, %v593
    %v595 = vadd.f32 %v361, %v544
    %v596 = vxor.u32 %v595, 2147483648
    %v597 = vmul.f32 %v596, 1.442695
    %v598 = vpow.pop %v597
    %v599 = vadd.f32 %v598, 1.0
    %v600 = vrcp.pop %v599
    %v601 = vmul.f32 1.0, %v600
    %v602 = vmul.f32 %v594, %v583
    %v603 = vadd.f32 %v362, %v602
    %v604 = vtanh.pop %v603
    %v605 = vsub.f32 0.0, %v604
    %v606 = vmul.f32 %v601, %v605
    %v607 = vadd.f32 %v604, %v606
    %vm608 = vcmp.ge.s32.totalorder %v359, 0
    %v609 = vsel %vm608, 1, 0
    %610 = vset.pattern.permute.xlu0 0
    %611 = vperm.xlu0 %610, %v609
    %v612 = vpop.permute.xlu0 %611
    %vm613 = vcmp.eq.s32.totalorder %v612, 1
    %v614 = vsel %vm613, %v607, 0.0
    %s615 = scalar_lea.vmem [#allocation2], 24
    %v616 = vld [vmem:[%s615] sm:$0xff]
    %v617 = vld [vmem:[%s615 + $0x8] sm:$0xff]
    %v618 = vld [vmem:[%s615 + $0x10] sm:$0xff]
    %v619 = vpack.c.bf16 %v614, %v614
    %620 = vmatprep.subr.bf16.mxu0 %v460
    %621 = vmatpush1.bf16.msra.mxu0 %v459
    %622 = vmatprep.subr.bf16.mxu0 %v463
    %623 = vmatpush1.bf16.msra.mxu0 %v462
    %624 = vmatprep.subr.bf16.mxu0 %v466
    %625 = vmatpush1.bf16.msra.mxu0 %v465
    %626 = vmatprep.subr.bf16.mxu0 %v469
    %627 = vmatpush1.bf16.msra.mxu0 %v468
    %628 = vmatprep.subr.bf16.mxu0 %v472
    %629 = vmatpush1.bf16.msra.mxu0 %v471
    %630 = vmatprep.subr.bf16.mxu0 %v475
    %631 = vmatpush1.bf16.msra.mxu0 %v474
    %632 = vmatprep.subr.bf16.mxu0 %v478
    %633 = vmatpush1.bf16.msra.mxu0 %v477
    %634 = vmatprep.subr.bf16.mxu0 %v481
    %635 = vmatpush1.bf16.msra.mxu0 %v480
    %636 = vmatprep.subr.bf16.mxu0 0
    %637 = vmatpush1.bf16.msra.mxu0 0
    %638 = vmatprep.subr.bf16.mxu0 0
    %639 = vmatpush1.bf16.msra.mxu0 0
    %640 = vmatprep.subr.bf16.mxu0 0
    %641 = vmatpush1.bf16.msra.mxu0 0
    %642 = vmatprep.subr.bf16.mxu0 0
    %643 = vmatpush1.bf16.msra.mxu0 0
    %644 = vmatprep.subr.bf16.mxu0 0
    %645 = vmatpush1.bf16.msra.mxu0 0
    %646 = vmatprep.subr.bf16.mxu0 0
    %647 = vmatpush1.bf16.msra.mxu0 0
    %648 = vmatprep.subr.bf16.mxu0 0
    %649 = vmatpush1.bf16.msra.mxu0 0
    %650 = vmatprep.subr.bf16.mxu0 0
    %651 = vmatpush1.bf16.msra.mxu0 0
    %652 = vmatprep.mubr.bf16.mxu0 0
    %653 = vmatmul.mubr.bf16.gmra.mrb[0].mxu0 %v619
    %v654 = vpop.f32.mrb[0].mxu0
    %v655 = vadd.f32 %v367, %v654
    %v656 = vpop.f32.mrb[0].mxu0
    %v657 = vadd.f32 %v371, %v656
    %v658 = vpop.f32.mrb[0].mxu0
    %v659 = vpop.f32.mrb[0].mxu0
    %660 = vdwg.mxu0
    %661 = vmatprep.subr.bf16.mxu0 0
    %662 = vmatpush1.bf16.msra.mxu0 %v461
    %663 = vmatprep.subr.bf16.mxu0 0
    %664 = vmatpush1.bf16.msra.mxu0 %v464
    %665 = vmatprep.subr.bf16.mxu0 0
    %666 = vmatpush1.bf16.msra.mxu0 %v467
    %667 = vmatprep.subr.bf16.mxu0 0
    %668 = vmatpush1.bf16.msra.mxu0 %v470
    %669 = vmatprep.subr.bf16.mxu0 0
    %670 = vmatpush1.bf16.msra.mxu0 %v473
    %671 = vmatprep.subr.bf16.mxu0 0
    %672 = vmatpush1.bf16.msra.mxu0 %v476
    %673 = vmatprep.subr.bf16.mxu0 0
    %674 = vmatpush1.bf16.msra.mxu0 %v479
    %675 = vmatprep.subr.bf16.mxu0 0
    %676 = vmatpush1.bf16.msra.mxu0 %v482
    %677 = vmatprep.subr.bf16.mxu0 0
    %678 = vmatpush1.bf16.msra.mxu0 0
    %679 = vmatprep.subr.bf16.mxu0 0
    %680 = vmatpush1.bf16.msra.mxu0 0
    %681 = vmatprep.subr.bf16.mxu0 0
    %682 = vmatpush1.bf16.msra.mxu0 0
    %683 = vmatprep.subr.bf16.mxu0 0
    %684 = vmatpush1.bf16.msra.mxu0 0
    %685 = vmatprep.subr.bf16.mxu0 0
    %686 = vmatpush1.bf16.msra.mxu0 0
    %687 = vmatprep.subr.bf16.mxu0 0
    %688 = vmatpush1.bf16.msra.mxu0 0
    %689 = vmatprep.subr.bf16.mxu0 0
    %690 = vmatpush1.bf16.msra.mxu0 0
    %691 = vmatprep.subr.bf16.mxu0 0
    %692 = vmatpush1.bf16.msra.mxu0 0
    %693 = vmatprep.mubr.bf16.mxu0 0
    %694 = vmatmul.mubr.bf16.gmra.mrb[0].mxu0 %v619
    %v695 = vpop.f32.mrb[0].mxu0
    %v696 = vadd.f32 %v375, %v695
    %v697 = vpop.f32.mrb[0].mxu0
    %v698 = vpop.f32.mrb[0].mxu0
    %v699 = vpop.f32.mrb[0].mxu0
    %700 = vdwg.mxu0
    %v701 = vadd.f32 %v616, %v655
    %v702 = vxor.u32 %v701, 2147483648
    %v703 = vmul.f32 %v702, 1.442695
    %v704 = vpow.pop %v703
    %v705 = vadd.f32 %v704, 1.0
    %v706 = vrcp.pop %v705
    %v707 = vmul.f32 1.0, %v706
    %v708 = vadd.f32 %v617, %v657
    %v709 = vxor.u32 %v708, 2147483648
    %v710 = vmul.f32 %v709, 1.442695
    %v711 = vpow.pop %v710
    %v712 = vadd.f32 %v711, 1.0
    %v713 = vrcp.pop %v712
    %v714 = vmul.f32 1.0, %v713
    %v715 = vmul.f32 %v707, %v696
    %v716 = vadd.f32 %v618, %v715
    %v717 = vtanh.pop %v716
    %v718 = vsub.f32 %v614, %v717
    %v719 = vmul.f32 %v714, %v718
    %v720 = vadd.f32 %v717, %v719
    %vm721 = vcmp.ge.s32.totalorder %v359, 1
    %v722 = vsel %vm721, 1, 0
    %723 = vset.pattern.permute.xlu0 0
    %724 = vperm.xlu0 %723, %v722
    %v725 = vpop.permute.xlu0 %724
    %vm726 = vcmp.eq.s32.totalorder %v725, 1
    %v727 = vsel %vm726, %v720, %v614
    %s728 = scalar_lea.vmem [#allocation2], 48
    %v729 = vld [vmem:[%s728] sm:$0xff]
    %v730 = vld [vmem:[%s728 + $0x8] sm:$0xff]
    %v731 = vld [vmem:[%s728 + $0x10] sm:$0xff]
    %v732 = vpack.c.bf16 %v727, %v727
    %733 = vmatprep.subr.bf16.mxu0 %v460
    %734 = vmatpush1.bf16.msra.mxu0 %v459
    %735 = vmatprep.subr.bf16.mxu0 %v463
    %736 = vmatpush1.bf16.msra.mxu0 %v462
    %737 = vmatprep.subr.bf16.mxu0 %v466
    %738 = vmatpush1.bf16.msra.mxu0 %v465
    %739 = vmatprep.subr.bf16.mxu0 %v469
    %740 = vmatpush1.bf16.msra.mxu0 %v468
    %741 = vmatprep.subr.bf16.mxu0 %v472
    %742 = vmatpush1.bf16.msra.mxu0 %v471
    %743 = vmatprep.subr.bf16.mxu0 %v475
    %744 = vmatpush1.bf16.msra.mxu0 %v474
    %745 = vmatprep.subr.bf16.mxu0 %v478
    %746 = vmatpush1.bf16.msra.mxu0 %v477
    %747 = vmatprep.subr.bf16.mxu0 %v481
    %748 = vmatpush1.bf16.msra.mxu0 %v480
    %749 = vmatprep.subr.bf16.mxu0 0
    %750 = vmatpush1.bf16.msra.mxu0 0
    %751 = vmatprep.subr.bf16.mxu0 0
    %752 = vmatpush1.bf16.msra.mxu0 0
    %753 = vmatprep.subr.bf16.mxu0 0
    %754 = vmatpush1.bf16.msra.mxu0 0
    %755 = vmatprep.subr.bf16.mxu0 0
    %756 = vmatpush1.bf16.msra.mxu0 0
    %757 = vmatprep.subr.bf16.mxu0 0
    %758 = vmatpush1.bf16.msra.mxu0 0
    %759 = vmatprep.subr.bf16.mxu0 0
    %760 = vmatpush1.bf16.msra.mxu0 0
    %761 = vmatprep.subr.bf16.mxu0 0
    %762 = vmatpush1.bf16.msra.mxu0 0
    %763 = vmatprep.subr.bf16.mxu0 0
    %764 = vmatpush1.bf16.msra.mxu0 0
    %765 = vmatprep.mubr.bf16.mxu0 0
    %766 = vmatmul.mubr.bf16.gmra.mrb[0].mxu0 %v732
    %v767 = vpop.f32.mrb[0].mxu0
    %v768 = vadd.f32 %v367, %v767
    %v769 = vpop.f32.mrb[0].mxu0
    %v770 = vadd.f32 %v371, %v769
    %v771 = vpop.f32.mrb[0].mxu0
    %v772 = vpop.f32.mrb[0].mxu0
    %773 = vdwg.mxu0
    %774 = vmatprep.subr.bf16.mxu0 0
    %775 = vmatpush1.bf16.msra.mxu0 %v461
    %776 = vmatprep.subr.bf16.mxu0 0
    %777 = vmatpush1.bf16.msra.mxu0 %v464
    %778 = vmatprep.subr.bf16.mxu0 0
    %779 = vmatpush1.bf16.msra.mxu0 %v467
    %780 = vmatprep.subr.bf16.mxu0 0
    %781 = vmatpush1.bf16.msra.mxu0 %v470
    %782 = vmatprep.subr.bf16.mxu0 0
    %783 = vmatpush1.bf16.msra.mxu0 %v473
    %784 = vmatprep.subr.bf16.mxu0 0
    %785 = vmatpush1.bf16.msra.mxu0 %v476
    %786 = vmatprep.subr.bf16.mxu0 0
    %787 = vmatpush1.bf16.msra.mxu0 %v479
    %788 = vmatprep.subr.bf16.mxu0 0
    %789 = vmatpush1.bf16.msra.mxu0 %v482
    %790 = vmatprep.subr.bf16.mxu0 0
    %791 = vmatpush1.bf16.msra.mxu0 0
    %792 = vmatprep.subr.bf16.mxu0 0
    %793 = vmatpush1.bf16.msra.mxu0 0
    %794 = vmatprep.subr.bf16.mxu0 0
    %795 = vmatpush1.bf16.msra.mxu0 0
    %796 = vmatprep.subr.bf16.mxu0 0
    %797 = vmatpush1.bf16.msra.mxu0 0
    %798 = vmatprep.subr.bf16.mxu0 0
    %799 = vmatpush1.bf16.msra.mxu0 0
    %800 = vmatprep.subr.bf16.mxu0 0
    %801 = vmatpush1.bf16.msra.mxu0 0
    %802 = vmatprep.subr.bf16.mxu0 0
    %803 = vmatpush1.bf16.msra.mxu0 0
    %804 = vmatprep.subr.bf16.mxu0 0
    %805 = vmatpush1.bf16.msra.mxu0 0
    %806 = vmatprep.mubr.bf16.mxu0 0
    %807 = vmatmul.mubr.bf16.gmra.mrb[0].mxu0 %v732
    %v808 = vpop.f32.mrb[0].mxu0
    %v809 = vadd.f32 %v375, %v808
    %v810 = vpop.f32.mrb[0].mxu0
    %v811 = vpop.f32.mrb[0].mxu0
    %v812 = vpop.f32.mrb[0].mxu0
    %813 = vdwg.mxu0
    %v814 = vadd.f32 %v729, %v768
    %v815 = vxor.u32 %v814, 2147483648
    %v816 = vmul.f32 %v815, 1.442695
    %v817 = vpow.pop %v816
    %v818 = vadd.f32 %v817, 1.0
    %v819 = vrcp.pop %v818
    %v820 = vmul.f32 1.0, %v819
    %v821 = vadd.f32 %v730, %v770
    %v822 = vxor.u32 %v821, 2147483648
    %v823 = vmul.f32 %v822, 1.442695
    %v824 = vpow.pop %v823
    %v825 = vadd.f32 %v824, 1.0
    %v826 = vrcp.pop %v825
    %v827 = vmul.f32 1.0, %v826
    %v828 = vmul.f32 %v820, %v809
    %v829 = vadd.f32 %v731, %v828
    %v830 = vtanh.pop %v829
    %v831 = vsub.f32 %v727, %v830
    %v832 = vmul.f32 %v827, %v831
    %v833 = vadd.f32 %v830, %v832
    %vm834 = vcmp.ge.s32.totalorder %v359, 2
    %v835 = vsel %vm834, 1, 0
    %836 = vset.pattern.permute.xlu0 0
    %837 = vperm.xlu0 %836, %v835
    %v838 = vpop.permute.xlu0 %837
    %vm839 = vcmp.eq.s32.totalorder %v838, 1
    %v840 = vsel %vm839, %v833, %v727
    %s841 = scalar_lea.vmem [#allocation2], 72
    %v842 = vld [vmem:[%s841] sm:$0xff]
    %v843 = vld [vmem:[%s841 + $0x8] sm:$0xff]
    %v844 = vld [vmem:[%s841 + $0x10] sm:$0xff]
    %v845 = vpack.c.bf16 %v840, %v840
    %846 = vmatprep.subr.bf16.mxu0 %v460
    %847 = vmatpush1.bf16.msra.mxu0 %v459
    %848 = vmatprep.subr.bf16.mxu0 %v463
    %849 = vmatpush1.bf16.msra.mxu0 %v462
    %850 = vmatprep.subr.bf16.mxu0 %v466
    %851 = vmatpush1.bf16.msra.mxu0 %v465
    %852 = vmatprep.subr.bf16.mxu0 %v469
    %853 = vmatpush1.bf16.msra.mxu0 %v468
    %854 = vmatprep.subr.bf16.mxu0 %v472
    %855 = vmatpush1.bf16.msra.mxu0 %v471
    %856 = vmatprep.subr.bf16.mxu0 %v475
    %857 = vmatpush1.bf16.msra.mxu0 %v474
    %858 = vmatprep.subr.bf16.mxu0 %v478
    %859 = vmatpush1.bf16.msra.mxu0 %v477
    %860 = vmatprep.subr.bf16.mxu0 %v481
    %861 = vmatpush1.bf16.msra.mxu0 %v480
    %862 = vmatprep.subr.bf16.mxu0 0
    %863 = vmatpush1.bf16.msra.mxu0 0
    %864 = vmatprep.subr.bf16.mxu0 0
    %865 = vmatpush1.bf16.msra.mxu0 0
    %866 = vmatprep.subr.bf16.mxu0 0
    %867 = vmatpush1.bf16.msra.mxu0 0
    %868 = vmatprep.subr.bf16.mxu0 0
    %869 = vmatpush1.bf16.msra.mxu0 0
    %870 = vmatprep.subr.bf16.mxu0 0
    %871 = vmatpush1.bf16.msra.mxu0 0
    %872 = vmatprep.subr.bf16.mxu0 0
    %873 = vmatpush1.bf16.msra.mxu0 0
    %874 = vmatprep.subr.bf16.mxu0 0
    %875 = vmatpush1.bf16.msra.mxu0 0
    %876 = vmatprep.subr.bf16.mxu0 0
    %877 = vmatpush1.bf16.msra.mxu0 0
    %878 = vmatprep.mubr.bf16.mxu0 0
    %879 = vmatmul.mubr.bf16.gmra.mrb[0].mxu0 %v845
    %v880 = vpop.f32.mrb[0].mxu0
    %v881 = vadd.f32 %v367, %v880
    %v882 = vpop.f32.mrb[0].mxu0
    %v883 = vadd.f32 %v371, %v882
    %v884 = vpop.f32.mrb[0].mxu0
    %v885 = vpop.f32.mrb[0].mxu0
    %886 = vdwg.mxu0
    %887 = vmatprep.subr.bf16.mxu0 0
    %888 = vmatpush1.bf16.msra.mxu0 %v461
    %889 = vmatprep.subr.bf16.mxu0 0
    %890 = vmatpush1.bf16.msra.mxu0 %v464
    %891 = vmatprep.subr.bf16.mxu0 0
    %892 = vmatpush1.bf16.msra.mxu0 %v467
    %893 = vmatprep.subr.bf16.mxu0 0
    %894 = vmatpush1.bf16.msra.mxu0 %v470
    %895 = vmatprep.subr.bf16.mxu0 0
    %896 = vmatpush1.bf16.msra.mxu0 %v473
    %897 = vmatprep.subr.bf16.mxu0 0
    %898 = vmatpush1.bf16.msra.mxu0 %v476
    %899 = vmatprep.subr.bf16.mxu0 0
    %900 = vmatpush1.bf16.msra.mxu0 %v479
    %901 = vmatprep.subr.bf16.mxu0 0
    %902 = vmatpush1.bf16.msra.mxu0 %v482
    %903 = vmatprep.subr.bf16.mxu0 0
    %904 = vmatpush1.bf16.msra.mxu0 0
    %905 = vmatprep.subr.bf16.mxu0 0
    %906 = vmatpush1.bf16.msra.mxu0 0
    %907 = vmatprep.subr.bf16.mxu0 0
    %908 = vmatpush1.bf16.msra.mxu0 0
    %909 = vmatprep.subr.bf16.mxu0 0
    %910 = vmatpush1.bf16.msra.mxu0 0
    %911 = vmatprep.subr.bf16.mxu0 0
    %912 = vmatpush1.bf16.msra.mxu0 0
    %913 = vmatprep.subr.bf16.mxu0 0
    %914 = vmatpush1.bf16.msra.mxu0 0
    %915 = vmatprep.subr.bf16.mxu0 0
    %916 = vmatpush1.bf16.msra.mxu0 0
    %917 = vmatprep.subr.bf16.mxu0 0
    %918 = vmatpush1.bf16.msra.mxu0 0
    %919 = vmatprep.mubr.bf16.mxu0 0
    %920 = vmatmul.mubr.bf16.gmra.mrb[0].mxu0 %v845
    %v921 = vpop.f32.mrb[0].mxu0
    %v922 = vadd.f32 %v375, %v921
    %v923 = vpop.f32.mrb[0].mxu0
    %v924 = vpop.f32.mrb[0].mxu0
    %v925 = vpop.f32.mrb[0].mxu0
    %926 = vdwg.mxu0
    %v927 = vadd.f32 %v842, %v881
    %v928 = vxor.u32 %v927, 2147483648
    %v929 = vmul.f32 %v928, 1.442695
    %v930 = vpow.pop %v929
    %v931 = vadd.f32 %v930, 1.0
    %v932 = vrcp.pop %v931
    %v933 = vmul.f32 1.0, %v932
    %v934 = vadd.f32 %v843, %v883
    %v935 = vxor.u32 %v934, 2147483648
    %v936 = vmul.f32 %v935, 1.442695
    %v937 = vpow.pop %v936
    %v938 = vadd.f32 %v937, 1.0
    %v939 = vrcp.pop %v938
    %v940 = vmul.f32 1.0, %v939
    %v941 = vmul.f32 %v933, %v922
    %v942 = vadd.f32 %v844, %v941
    %v943 = vtanh.pop %v942
    %v944 = vsub.f32 %v840, %v943
    %v945 = vmul.f32 %v940, %v944
    %v946 = vadd.f32 %v943, %v945
    %vm947 = vcmp.ge.s32.totalorder %v359, 3
    %v948 = vsel %vm947, 1, 0
    %949 = vset.pattern.permute.xlu0 0
    %950 = vperm.xlu0 %949, %v948
    %v951 = vpop.permute.xlu0 %950
    %vm952 = vcmp.eq.s32.totalorder %v951, 1
    %v953 = vsel %vm952, %v946, %v840
    %s954 = scalar_lea.vmem [#allocation2], 96
    %v955 = vld [vmem:[%s954] sm:$0xff]
    %v956 = vld [vmem:[%s954 + $0x8] sm:$0xff]
    %v957 = vld [vmem:[%s954 + $0x10] sm:$0xff]
    %v958 = vpack.c.bf16 %v953, %v953
    %959 = vmatprep.subr.bf16.mxu0 %v460
    %960 = vmatpush1.bf16.msra.mxu0 %v459
    %961 = vmatprep.subr.bf16.mxu0 %v463
    %962 = vmatpush1.bf16.msra.mxu0 %v462
    %963 = vmatprep.subr.bf16.mxu0 %v466
    %964 = vmatpush1.bf16.msra.mxu0 %v465
    %965 = vmatprep.subr.bf16.mxu0 %v469
    %966 = vmatpush1.bf16.msra.mxu0 %v468
    %967 = vmatprep.subr.bf16.mxu0 %v472
    %968 = vmatpush1.bf16.msra.mxu0 %v471
    %969 = vmatprep.subr.bf16.mxu0 %v475
    %970 = vmatpush1.bf16.msra.mxu0 %v474
    %971 = vmatprep.subr.bf16.mxu0 %v478
    %972 = vmatpush1.bf16.msra.mxu0 %v477
    %973 = vmatprep.subr.bf16.mxu0 %v481
    %974 = vmatpush1.bf16.msra.mxu0 %v480
    %975 = vmatprep.subr.bf16.mxu0 0
    %976 = vmatpush1.bf16.msra.mxu0 0
    %977 = vmatprep.subr.bf16.mxu0 0
    %978 = vmatpush1.bf16.msra.mxu0 0
    %979 = vmatprep.subr.bf16.mxu0 0
    %980 = vmatpush1.bf16.msra.mxu0 0
    %981 = vmatprep.subr.bf16.mxu0 0
    %982 = vmatpush1.bf16.msra.mxu0 0
    %983 = vmatprep.subr.bf16.mxu0 0
    %984 = vmatpush1.bf16.msra.mxu0 0
    %985 = vmatprep.subr.bf16.mxu0 0
    %986 = vmatpush1.bf16.msra.mxu0 0
    %987 = vmatprep.subr.bf16.mxu0 0
    %988 = vmatpush1.bf16.msra.mxu0 0
    %989 = vmatprep.subr.bf16.mxu0 0
    %990 = vmatpush1.bf16.msra.mxu0 0
    %991 = vmatprep.mubr.bf16.mxu0 0
    %992 = vmatmul.mubr.bf16.gmra.mrb[0].mxu0 %v958
    %v993 = vpop.f32.mrb[0].mxu0
    %v994 = vadd.f32 %v367, %v993
    %v995 = vpop.f32.mrb[0].mxu0
    %v996 = vadd.f32 %v371, %v995
    %v997 = vpop.f32.mrb[0].mxu0
    %v998 = vpop.f32.mrb[0].mxu0
    %999 = vdwg.mxu0
    %1000 = vmatprep.subr.bf16.mxu0 0
    %1001 = vmatpush1.bf16.msra.mxu0 %v461
    %1002 = vmatprep.subr.bf16.mxu0 0
    %1003 = vmatpush1.bf16.msra.mxu0 %v464
    %1004 = vmatprep.subr.bf16.mxu0 0
    %1005 = vmatpush1.bf16.msra.mxu0 %v467
    %1006 = vmatprep.subr.bf16.mxu0 0
    %1007 = vmatpush1.bf16.msra.mxu0 %v470
    %1008 = vmatprep.subr.bf16.mxu0 0
    %1009 = vmatpush1.bf16.msra.mxu0 %v473
    %1010 = vmatprep.subr.bf16.mxu0 0
    %1011 = vmatpush1.bf16.msra.mxu0 %v476
    %1012 = vmatprep.subr.bf16.mxu0 0
    %1013 = vmatpush1.bf16.msra.mxu0 %v479
    %1014 = vmatprep.subr.bf16.mxu0 0
    %1015 = vmatpush1.bf16.msra.mxu0 %v482
    %1016 = vmatprep.subr.bf16.mxu0 0
    %1017 = vmatpush1.bf16.msra.mxu0 0
    %1018 = vmatprep.subr.bf16.mxu0 0
    %1019 = vmatpush1.bf16.msra.mxu0 0
    %1020 = vmatprep.subr.bf16.mxu0 0
    %1021 = vmatpush1.bf16.msra.mxu0 0
    %1022 = vmatprep.subr.bf16.mxu0 0
    %1023 = vmatpush1.bf16.msra.mxu0 0
    %1024 = vmatprep.subr.bf16.mxu0 0
    %1025 = vmatpush1.bf16.msra.mxu0 0
    %1026 = vmatprep.subr.bf16.mxu0 0
    %1027 = vmatpush1.bf16.msra.mxu0 0
    %1028 = vmatprep.subr.bf16.mxu0 0
    %1029 = vmatpush1.bf16.msra.mxu0 0
    %1030 = vmatprep.subr.bf16.mxu0 0
    %1031 = vmatpush1.bf16.msra.mxu0 0
    %1032 = vmatprep.mubr.bf16.mxu0 0
    %1033 = vmatmul.mubr.bf16.gmra.mrb[0].mxu0 %v958
    %v1034 = vpop.f32.mrb[0].mxu0
    %v1035 = vadd.f32 %v375, %v1034
    %v1036 = vpop.f32.mrb[0].mxu0
    %v1037 = vpop.f32.mrb[0].mxu0
    %v1038 = vpop.f32.mrb[0].mxu0
    %1039 = vdwg.mxu0
    %v1040 = vadd.f32 %v955, %v994
    %v1041 = vxor.u32 %v1040, 2147483648
    %v1042 = vmul.f32 %v1041, 1.442695
    %v1043 = vpow.pop %v1042
    %v1044 = vadd.f32 %v1043, 1.0
    %v1045 = vrcp.pop %v1044
    %v1046 = vmul.f32 1.0, %v1045
    %v1047 = vadd.f32 %v956, %v996
    %v1048 = vxor.u32 %v1047, 2147483648
    %v1049 = vmul.f32 %v1048, 1.442695
    %v1050 = vpow.pop %v1049
    %v1051 = vadd.f32 %v1050, 1.0
    %v1052 = vrcp.pop %v1051
    %v1053 = vmul.f32 1.0, %v1052
    %v1054 = vmul.f32 %v1046, %v1035
    %v1055 = vadd.f32 %v957, %v1054
    %v1056 = vtanh.pop %v1055
    %v1057 = vsub.f32 %v953, %v1056
    %v1058 = vmul.f32 %v1053, %v1057
    %v1059 = vadd.f32 %v1056, %v1058
    %vm1060 = vcmp.ge.s32.totalorder %v359, 4
    %v1061 = vsel %vm1060, 1, 0
    %1062 = vset.pattern.permute.xlu0 0
    %1063 = vperm.xlu0 %1062, %v1061
    %v1064 = vpop.permute.xlu0 %1063
    %vm1065 = vcmp.eq.s32.totalorder %v1064, 1
    %v1066 = vsel %vm1065, %v1059, %v953
    %s1067 = scalar_lea.vmem [#allocation2], 120
    %v1068 = vld [vmem:[%s1067] sm:$0xff]
    %v1069 = vld [vmem:[%s1067 + $0x8] sm:$0xff]
    %v1070 = vld [vmem:[%s1067 + $0x10] sm:$0xff]
    %v1071 = vpack.c.bf16 %v1066, %v1066
    %1072 = vmatprep.subr.bf16.mxu0 %v460
    %1073 = vmatpush1.bf16.msra.mxu0 %v459
    %1074 = vmatprep.subr.bf16.mxu0 %v463
    %1075 = vmatpush1.bf16.msra.mxu0 %v462
    %1076 = vmatprep.subr.bf16.mxu0 %v466
    %1077 = vmatpush1.bf16.msra.mxu0 %v465
    %1078 = vmatprep.subr.bf16.mxu0 %v469
    %1079 = vmatpush1.bf16.msra.mxu0 %v468
    %1080 = vmatprep.subr.bf16.mxu0 %v472
    %1081 = vmatpush1.bf16.msra.mxu0 %v471
    %1082 = vmatprep.subr.bf16.mxu0 %v475
    %1083 = vmatpush1.bf16.msra.mxu0 %v474
    %1084 = vmatprep.subr.bf16.mxu0 %v478
    %1085 = vmatpush1.bf16.msra.mxu0 %v477
    %1086 = vmatprep.subr.bf16.mxu0 %v481
    %1087 = vmatpush1.bf16.msra.mxu0 %v480
    %1088 = vmatprep.subr.bf16.mxu0 0
    %1089 = vmatpush1.bf16.msra.mxu0 0
    %1090 = vmatprep.subr.bf16.mxu0 0
    %1091 = vmatpush1.bf16.msra.mxu0 0
    %1092 = vmatprep.subr.bf16.mxu0 0
    %1093 = vmatpush1.bf16.msra.mxu0 0
    %1094 = vmatprep.subr.bf16.mxu0 0
    %1095 = vmatpush1.bf16.msra.mxu0 0
    %1096 = vmatprep.subr.bf16.mxu0 0
    %1097 = vmatpush1.bf16.msra.mxu0 0
    %1098 = vmatprep.subr.bf16.mxu0 0
    %1099 = vmatpush1.bf16.msra.mxu0 0
    %1100 = vmatprep.subr.bf16.mxu0 0
    %1101 = vmatpush1.bf16.msra.mxu0 0
    %1102 = vmatprep.subr.bf16.mxu0 0
    %1103 = vmatpush1.bf16.msra.mxu0 0
    %1104 = vmatprep.mubr.bf16.mxu0 0
    %1105 = vmatmul.mubr.bf16.gmra.mrb[0].mxu0 %v1071
    %v1106 = vpop.f32.mrb[0].mxu0
    %v1107 = vadd.f32 %v367, %v1106
    %v1108 = vpop.f32.mrb[0].mxu0
    %v1109 = vadd.f32 %v371, %v1108
    %v1110 = vpop.f32.mrb[0].mxu0
    %v1111 = vpop.f32.mrb[0].mxu0
    %1112 = vdwg.mxu0
    %1113 = vmatprep.subr.bf16.mxu0 0
    %1114 = vmatpush1.bf16.msra.mxu0 %v461
    %1115 = vmatprep.subr.bf16.mxu0 0
    %1116 = vmatpush1.bf16.msra.mxu0 %v464
    %1117 = vmatprep.subr.bf16.mxu0 0
    %1118 = vmatpush1.bf16.msra.mxu0 %v467
    %1119 = vmatprep.subr.bf16.mxu0 0
    %1120 = vmatpush1.bf16.msra.mxu0 %v470
    %1121 = vmatprep.subr.bf16.mxu0 0
    %1122 = vmatpush1.bf16.msra.mxu0 %v473
    %1123 = vmatprep.subr.bf16.mxu0 0
    %1124 = vmatpush1.bf16.msra.mxu0 %v476
    %1125 = vmatprep.subr.bf16.mxu0 0
    %1126 = vmatpush1.bf16.msra.mxu0 %v479
    %1127 = vmatprep.subr.bf16.mxu0 0
    %1128 = vmatpush1.bf16.msra.mxu0 %v482
    %1129 = vmatprep.subr.bf16.mxu0 0
    %1130 = vmatpush1.bf16.msra.mxu0 0
    %1131 = vmatprep.subr.bf16.mxu0 0
    %1132 = vmatpush1.bf16.msra.mxu0 0
    %1133 = vmatprep.subr.bf16.mxu0 0
    %1134 = vmatpush1.bf16.msra.mxu0 0
    %1135 = vmatprep.subr.bf16.mxu0 0
    %1136 = vmatpush1.bf16.msra.mxu0 0
    %1137 = vmatprep.subr.bf16.mxu0 0
    %1138 = vmatpush1.bf16.msra.mxu0 0
    %1139 = vmatprep.subr.bf16.mxu0 0
    %1140 = vmatpush1.bf16.msra.mxu0 0
    %1141 = vmatprep.subr.bf16.mxu0 0
    %1142 = vmatpush1.bf16.msra.mxu0 0
    %1143 = vmatprep.subr.bf16.mxu0 0
    %1144 = vmatpush1.bf16.msra.mxu0 0
    %1145 = vmatprep.mubr.bf16.mxu0 0
    %1146 = vmatmul.mubr.bf16.gmra.mrb[0].mxu0 %v1071
    %v1147 = vpop.f32.mrb[0].mxu0
    %v1148 = vadd.f32 %v375, %v1147
    %v1149 = vpop.f32.mrb[0].mxu0
    %v1150 = vpop.f32.mrb[0].mxu0
    %v1151 = vpop.f32.mrb[0].mxu0
    %1152 = vdwg.mxu0
    %v1153 = vadd.f32 %v1068, %v1107
    %v1154 = vxor.u32 %v1153, 2147483648
    %v1155 = vmul.f32 %v1154, 1.442695
    %v1156 = vpow.pop %v1155
    %v1157 = vadd.f32 %v1156, 1.0
    %v1158 = vrcp.pop %v1157
    %v1159 = vmul.f32 1.0, %v1158
    %v1160 = vadd.f32 %v1069, %v1109
    %v1161 = vxor.u32 %v1160, 2147483648
    %v1162 = vmul.f32 %v1161, 1.442695
    %v1163 = vpow.pop %v1162
    %v1164 = vadd.f32 %v1163, 1.0
    %v1165 = vrcp.pop %v1164
    %v1166 = vmul.f32 1.0, %v1165
    %v1167 = vmul.f32 %v1159, %v1148
    %v1168 = vadd.f32 %v1070, %v1167
    %v1169 = vtanh.pop %v1168
    %v1170 = vsub.f32 %v1066, %v1169
    %v1171 = vmul.f32 %v1166, %v1170
    %v1172 = vadd.f32 %v1169, %v1171
    %vm1173 = vcmp.ge.s32.totalorder %v359, 5
    %v1174 = vsel %vm1173, 1, 0
    %1175 = vset.pattern.permute.xlu0 0
    %1176 = vperm.xlu0 %1175, %v1174
    %v1177 = vpop.permute.xlu0 %1176
    %vm1178 = vcmp.eq.s32.totalorder %v1177, 1
    %v1179 = vsel %vm1178, %v1172, %v1066
    %s1180 = scalar_lea.vmem [#allocation2], 144
    %v1181 = vld [vmem:[%s1180] sm:$0xff]
    %v1182 = vld [vmem:[%s1180 + $0x8] sm:$0xff]
    %v1183 = vld [vmem:[%s1180 + $0x10] sm:$0xff]
    %v1184 = vpack.c.bf16 %v1179, %v1179
    %1185 = vmatprep.subr.bf16.mxu0 %v460
    %1186 = vmatpush1.bf16.msra.mxu0 %v459
    %1187 = vmatprep.subr.bf16.mxu0 %v463
    %1188 = vmatpush1.bf16.msra.mxu0 %v462
    %1189 = vmatprep.subr.bf16.mxu0 %v466
    %1190 = vmatpush1.bf16.msra.mxu0 %v465
    %1191 = vmatprep.subr.bf16.mxu0 %v469
    %1192 = vmatpush1.bf16.msra.mxu0 %v468
    %1193 = vmatprep.subr.bf16.mxu0 %v472
    %1194 = vmatpush1.bf16.msra.mxu0 %v471
    %1195 = vmatprep.subr.bf16.mxu0 %v475
    %1196 = vmatpush1.bf16.msra.mxu0 %v474
    %1197 = vmatprep.subr.bf16.mxu0 %v478
    %1198 = vmatpush1.bf16.msra.mxu0 %v477
    %1199 = vmatprep.subr.bf16.mxu0 %v481
    %1200 = vmatpush1.bf16.msra.mxu0 %v480
    %1201 = vmatprep.subr.bf16.mxu0 0
    %1202 = vmatpush1.bf16.msra.mxu0 0
    %1203 = vmatprep.subr.bf16.mxu0 0
    %1204 = vmatpush1.bf16.msra.mxu0 0
    %1205 = vmatprep.subr.bf16.mxu0 0
    %1206 = vmatpush1.bf16.msra.mxu0 0
    %1207 = vmatprep.subr.bf16.mxu0 0
    %1208 = vmatpush1.bf16.msra.mxu0 0
    %1209 = vmatprep.subr.bf16.mxu0 0
    %1210 = vmatpush1.bf16.msra.mxu0 0
    %1211 = vmatprep.subr.bf16.mxu0 0
    %1212 = vmatpush1.bf16.msra.mxu0 0
    %1213 = vmatprep.subr.bf16.mxu0 0
    %1214 = vmatpush1.bf16.msra.mxu0 0
    %1215 = vmatprep.subr.bf16.mxu0 0
    %1216 = vmatpush1.bf16.msra.mxu0 0
    %1217 = vmatprep.mubr.bf16.mxu0 0
    %1218 = vmatmul.mubr.bf16.gmra.mrb[0].mxu0 %v1184
    %v1219 = vpop.f32.mrb[0].mxu0
    %v1220 = vadd.f32 %v367, %v1219
    %v1221 = vpop.f32.mrb[0].mxu0
    %v1222 = vadd.f32 %v371, %v1221
    %v1223 = vpop.f32.mrb[0].mxu0
    %v1224 = vpop.f32.mrb[0].mxu0
    %1225 = vdwg.mxu0
    %1226 = vmatprep.subr.bf16.mxu0 0
    %1227 = vmatpush1.bf16.msra.mxu0 %v461
    %1228 = vmatprep.subr.bf16.mxu0 0
    %1229 = vmatpush1.bf16.msra.mxu0 %v464
    %1230 = vmatprep.subr.bf16.mxu0 0
    %1231 = vmatpush1.bf16.msra.mxu0 %v467
    %1232 = vmatprep.subr.bf16.mxu0 0
    %1233 = vmatpush1.bf16.msra.mxu0 %v470
    %1234 = vmatprep.subr.bf16.mxu0 0
    %1235 = vmatpush1.bf16.msra.mxu0 %v473
    %1236 = vmatprep.subr.bf16.mxu0 0
    %1237 = vmatpush1.bf16.msra.mxu0 %v476
    %1238 = vmatprep.subr.bf16.mxu0 0
    %1239 = vmatpush1.bf16.msra.mxu0 %v479
    %1240 = vmatprep.subr.bf16.mxu0 0
    %1241 = vmatpush1.bf16.msra.mxu0 %v482
    %1242 = vmatprep.subr.bf16.mxu0 0
    %1243 = vmatpush1.bf16.msra.mxu0 0
    %1244 = vmatprep.subr.bf16.mxu0 0
    %1245 = vmatpush1.bf16.msra.mxu0 0
    %1246 = vmatprep.subr.bf16.mxu0 0
    %1247 = vmatpush1.bf16.msra.mxu0 0
    %1248 = vmatprep.subr.bf16.mxu0 0
    %1249 = vmatpush1.bf16.msra.mxu0 0
    %1250 = vmatprep.subr.bf16.mxu0 0
    %1251 = vmatpush1.bf16.msra.mxu0 0
    %1252 = vmatprep.subr.bf16.mxu0 0
    %1253 = vmatpush1.bf16.msra.mxu0 0
    %1254 = vmatprep.subr.bf16.mxu0 0
    %1255 = vmatpush1.bf16.msra.mxu0 0
    %1256 = vmatprep.subr.bf16.mxu0 0
    %1257 = vmatpush1.bf16.msra.mxu0 0
    %1258 = vmatprep.mubr.bf16.mxu0 0
    %1259 = vmatmul.mubr.bf16.gmra.mrb[0].mxu0 %v1184
    %v1260 = vpop.f32.mrb[0].mxu0
    %v1261 = vadd.f32 %v375, %v1260
    %v1262 = vpop.f32.mrb[0].mxu0
    %v1263 = vpop.f32.mrb[0].mxu0
    %v1264 = vpop.f32.mrb[0].mxu0
    %1265 = vdwg.mxu0
    %v1266 = vadd.f32 %v1181, %v1220
    %v1267 = vxor.u32 %v1266, 2147483648
    %v1268 = vmul.f32 %v1267, 1.442695
    %v1269 = vpow.pop %v1268
    %v1270 = vadd.f32 %v1269, 1.0
    %v1271 = vrcp.pop %v1270
    %v1272 = vmul.f32 1.0, %v1271
    %v1273 = vadd.f32 %v1182, %v1222
    %v1274 = vxor.u32 %v1273, 2147483648
    %v1275 = vmul.f32 %v1274, 1.442695
    %v1276 = vpow.pop %v1275
    %v1277 = vadd.f32 %v1276, 1.0
    %v1278 = vrcp.pop %v1277
    %v1279 = vmul.f32 1.0, %v1278
    %v1280 = vmul.f32 %v1272, %v1261
    %v1281 = vadd.f32 %v1183, %v1280
    %v1282 = vtanh.pop %v1281
    %v1283 = vsub.f32 %v1179, %v1282
    %v1284 = vmul.f32 %v1279, %v1283
    %v1285 = vadd.f32 %v1282, %v1284
    %vm1286 = vcmp.ge.s32.totalorder %v359, 6
    %v1287 = vsel %vm1286, 1, 0
    %1288 = vset.pattern.permute.xlu0 0
    %1289 = vperm.xlu0 %1288, %v1287
    %v1290 = vpop.permute.xlu0 %1289
    %vm1291 = vcmp.eq.s32.totalorder %v1290, 1
    %v1292 = vsel %vm1291, %v1285, %v1179
    %s1293 = scalar_lea.vmem [#allocation2], 168
    %v1294 = vld [vmem:[%s1293] sm:$0xff]
    %v1295 = vld [vmem:[%s1293 + $0x8] sm:$0xff]
    %v1296 = vld [vmem:[%s1293 + $0x10] sm:$0xff]
    %v1297 = vpack.c.bf16 %v1292, %v1292
    %1298 = vmatprep.subr.bf16.mxu0 %v460
    %1299 = vmatpush1.bf16.msra.mxu0 %v459
    %1300 = vmatprep.subr.bf16.mxu0 %v463
    %1301 = vmatpush1.bf16.msra.mxu0 %v462
    %1302 = vmatprep.subr.bf16.mxu0 %v466
    %1303 = vmatpush1.bf16.msra.mxu0 %v465
    %1304 = vmatprep.subr.bf16.mxu0 %v469
    %1305 = vmatpush1.bf16.msra.mxu0 %v468
    %1306 = vmatprep.subr.bf16.mxu0 %v472
    %1307 = vmatpush1.bf16.msra.mxu0 %v471
    %1308 = vmatprep.subr.bf16.mxu0 %v475
    %1309 = vmatpush1.bf16.msra.mxu0 %v474
    %1310 = vmatprep.subr.bf16.mxu0 %v478
    %1311 = vmatpush1.bf16.msra.mxu0 %v477
    %1312 = vmatprep.subr.bf16.mxu0 %v481
    %1313 = vmatpush1.bf16.msra.mxu0 %v480
    %1314 = vmatprep.subr.bf16.mxu0 0
    %1315 = vmatpush1.bf16.msra.mxu0 0
    %1316 = vmatprep.subr.bf16.mxu0 0
    %1317 = vmatpush1.bf16.msra.mxu0 0
    %1318 = vmatprep.subr.bf16.mxu0 0
    %1319 = vmatpush1.bf16.msra.mxu0 0
    %1320 = vmatprep.subr.bf16.mxu0 0
    %1321 = vmatpush1.bf16.msra.mxu0 0
    %1322 = vmatprep.subr.bf16.mxu0 0
    %1323 = vmatpush1.bf16.msra.mxu0 0
    %1324 = vmatprep.subr.bf16.mxu0 0
    %1325 = vmatpush1.bf16.msra.mxu0 0
    %1326 = vmatprep.subr.bf16.mxu0 0
    %1327 = vmatpush1.bf16.msra.mxu0 0
    %1328 = vmatprep.subr.bf16.mxu0 0
    %1329 = vmatpush1.bf16.msra.mxu0 0
    %1330 = vmatprep.mubr.bf16.mxu0 0
    %1331 = vmatmul.mubr.bf16.gmra.mrb[0].mxu0 %v1297
    %v1332 = vpop.f32.mrb[0].mxu0
    %v1333 = vadd.f32 %v367, %v1332
    %v1334 = vpop.f32.mrb[0].mxu0
    %v1335 = vadd.f32 %v371, %v1334
    %v1336 = vpop.f32.mrb[0].mxu0
    %v1337 = vpop.f32.mrb[0].mxu0
    %1338 = vdwg.mxu0
    %1339 = vmatprep.subr.bf16.mxu0 0
    %1340 = vmatpush1.bf16.msra.mxu0 %v461
    %1341 = vmatprep.subr.bf16.mxu0 0
    %1342 = vmatpush1.bf16.msra.mxu0 %v464
    %1343 = vmatprep.subr.bf16.mxu0 0
    %1344 = vmatpush1.bf16.msra.mxu0 %v467
    %1345 = vmatprep.subr.bf16.mxu0 0
    %1346 = vmatpush1.bf16.msra.mxu0 %v470
    %1347 = vmatprep.subr.bf16.mxu0 0
    %1348 = vmatpush1.bf16.msra.mxu0 %v473
    %1349 = vmatprep.subr.bf16.mxu0 0
    %1350 = vmatpush1.bf16.msra.mxu0 %v476
    %1351 = vmatprep.subr.bf16.mxu0 0
    %1352 = vmatpush1.bf16.msra.mxu0 %v479
    %1353 = vmatprep.subr.bf16.mxu0 0
    %1354 = vmatpush1.bf16.msra.mxu0 %v482
    %1355 = vmatprep.subr.bf16.mxu0 0
    %1356 = vmatpush1.bf16.msra.mxu0 0
    %1357 = vmatprep.subr.bf16.mxu0 0
    %1358 = vmatpush1.bf16.msra.mxu0 0
    %1359 = vmatprep.subr.bf16.mxu0 0
    %1360 = vmatpush1.bf16.msra.mxu0 0
    %1361 = vmatprep.subr.bf16.mxu0 0
    %1362 = vmatpush1.bf16.msra.mxu0 0
    %1363 = vmatprep.subr.bf16.mxu0 0
    %1364 = vmatpush1.bf16.msra.mxu0 0
    %1365 = vmatprep.subr.bf16.mxu0 0
    %1366 = vmatpush1.bf16.msra.mxu0 0
    %1367 = vmatprep.subr.bf16.mxu0 0
    %1368 = vmatpush1.bf16.msra.mxu0 0
    %1369 = vmatprep.subr.bf16.mxu0 0
    %1370 = vmatpush1.bf16.msra.mxu0 0
    %1371 = vmatprep.mubr.bf16.mxu0 0
    %1372 = vmatmul.mubr.bf16.gmra.mrb[0].mxu0 %v1297
    %v1373 = vpop.f32.mrb[0].mxu0
    %v1374 = vadd.f32 %v375, %v1373
    %v1375 = vpop.f32.mrb[0].mxu0
    %v1376 = vpop.f32.mrb[0].mxu0
    %v1377 = vpop.f32.mrb[0].mxu0
    %1378 = vdwg.mxu0
    %v1379 = vadd.f32 %v1294, %v1333
    %v1380 = vxor.u32 %v1379, 2147483648
    %v1381 = vmul.f32 %v1380, 1.442695
    %v1382 = vpow.pop %v1381
    %v1383 = vadd.f32 %v1382, 1.0
    %v1384 = vrcp.pop %v1383
    %v1385 = vmul.f32 1.0, %v1384
    %v1386 = vadd.f32 %v1295, %v1335
    %v1387 = vxor.u32 %v1386, 2147483648
    %v1388 = vmul.f32 %v1387, 1.442695
    %v1389 = vpow.pop %v1388
    %v1390 = vadd.f32 %v1389, 1.0
    %v1391 = vrcp.pop %v1390
    %v1392 = vmul.f32 1.0, %v1391
    %v1393 = vmul.f32 %v1385, %v1374
    %v1394 = vadd.f32 %v1296, %v1393
    %v1395 = vtanh.pop %v1394
    %v1396 = vsub.f32 %v1292, %v1395
    %v1397 = vmul.f32 %v1392, %v1396
    %v1398 = vadd.f32 %v1395, %v1397
    %vm1399 = vcmp.ge.s32.totalorder %v359, 7
    %v1400 = vsel %vm1399, 1, 0
    %1401 = vset.pattern.permute.xlu0 0
    %1402 = vperm.xlu0 %1401, %v1400
    %v1403 = vpop.permute.xlu0 %1402
    %vm1404 = vcmp.eq.s32.totalorder %v1403, 1
    %v1405 = vsel %vm1404, %v1398, %v1292
    %v1406 = vpack.c.bf16 %v1405, %v1405
    %v1407 = vld [vmem:[%s7] sm:$0xf]
    %v1408 = vld [vmem:[%s7 + $0x4] sm:$0xf]
    %v1409 = vld [vmem:[%s7 + $0x8] sm:$0xf]
    %v1410 = vld [vmem:[%s7 + $0xc] sm:$0xf]
    %v1411 = vld [vmem:[%s7 + $0x10] sm:$0xf]
    %v1412 = vld [vmem:[%s7 + $0x14] sm:$0xf]
    %v1413 = vld [vmem:[%s7 + $0x18] sm:$0xf]
    %v1414 = vld [vmem:[%s7 + $0x1c] sm:$0xf]
    %v1415 = vld [vmem:[%s7 + $0x20] sm:$0xf]
    %v1416 = vld [vmem:[%s7 + $0x24] sm:$0xf]
    %v1417 = vld [vmem:[%s7 + $0x28] sm:$0xf]
    %v1418 = vld [vmem:[%s7 + $0x2c] sm:$0xf]
    %v1419 = vld [vmem:[%s7 + $0x30] sm:$0xf]
    %v1420 = vld [vmem:[%s7 + $0x34] sm:$0xf]
    %v1421 = vld [vmem:[%s7 + $0x38] sm:$0xf]
    %v1422 = vld [vmem:[%s7 + $0x3c] sm:$0xf]
    %v1423 = vld [vmem:[%s8] sm:$0x1]
    %v1425 = vlaneseq
    %v1426 = vshrl.u32 %v1425, 7
    %v1427 = vsub.s32 0, %v1426
    %v1428 = vrot.slane %v1423, %v1427
    %v1446 = vunpack.c.l.b16 %v1407
    %v1447 = vunpack.c.l.b16 %v1408
    %v1448 = vunpack.c.l.b16 %v1409
    %v1449 = vunpack.c.l.b16 %v1410
    %v1450 = vunpack.c.l.b16 %v1411
    %v1451 = vunpack.c.l.b16 %v1412
    %v1452 = vunpack.c.l.b16 %v1413
    %v1453 = vunpack.c.l.b16 %v1414
    %v1454 = vunpack.c.l.b16 %v1415
    %v1455 = vunpack.c.l.b16 %v1416
    %v1456 = vunpack.c.l.b16 %v1417
    %v1457 = vunpack.c.l.b16 %v1418
    %v1458 = vunpack.c.l.b16 %v1419
    %v1459 = vunpack.c.l.b16 %v1420
    %v1460 = vunpack.c.l.b16 %v1421
    %v1461 = vunpack.c.l.b16 %v1422
    %v1462 = vpack.c.b16 %v1447, %v1446
    %v1463 = vpack.c.b16 %v1449, %v1448
    %v1464 = vpack.c.b16 %v1451, %v1450
    %v1465 = vpack.c.b16 %v1453, %v1452
    %v1466 = vpack.c.b16 %v1455, %v1454
    %v1467 = vpack.c.b16 %v1457, %v1456
    %v1468 = vpack.c.b16 %v1459, %v1458
    %v1469 = vpack.c.b16 %v1461, %v1460
    %1478 = vmatprep.subr.bf16.mxu0 0
    %1479 = vmatpush1.bf16.msra.mxu0 %v1462
    %1480 = vmatprep.subr.bf16.mxu0 0
    %1481 = vmatpush1.bf16.msra.mxu0 %v1463
    %1482 = vmatprep.subr.bf16.mxu0 0
    %1483 = vmatpush1.bf16.msra.mxu0 %v1464
    %1484 = vmatprep.subr.bf16.mxu0 0
    %1485 = vmatpush1.bf16.msra.mxu0 %v1465
    %1486 = vmatprep.subr.bf16.mxu0 0
    %1487 = vmatpush1.bf16.msra.mxu0 %v1466
    %1488 = vmatprep.subr.bf16.mxu0 0
    %1489 = vmatpush1.bf16.msra.mxu0 %v1467
    %1490 = vmatprep.subr.bf16.mxu0 0
    %1491 = vmatpush1.bf16.msra.mxu0 %v1468
    %1492 = vmatprep.subr.bf16.mxu0 0
    %1493 = vmatpush1.bf16.msra.mxu0 %v1469
    %1494 = vmatprep.subr.bf16.mxu0 0
    %1495 = vmatpush1.bf16.msra.mxu0 0
    %1496 = vmatprep.subr.bf16.mxu0 0
    %1497 = vmatpush1.bf16.msra.mxu0 0
    %1498 = vmatprep.subr.bf16.mxu0 0
    %1499 = vmatpush1.bf16.msra.mxu0 0
    %1500 = vmatprep.subr.bf16.mxu0 0
    %1501 = vmatpush1.bf16.msra.mxu0 0
    %1502 = vmatprep.subr.bf16.mxu0 0
    %1503 = vmatpush1.bf16.msra.mxu0 0
    %1504 = vmatprep.subr.bf16.mxu0 0
    %1505 = vmatpush1.bf16.msra.mxu0 0
    %1506 = vmatprep.subr.bf16.mxu0 0
    %1507 = vmatpush1.bf16.msra.mxu0 0
    %1508 = vmatprep.subr.bf16.mxu0 0
    %1509 = vmatpush1.bf16.msra.mxu0 0
    %1510 = vmatprep.mubr.bf16.mxu0 0
    %1511 = vmatmul.mubr.bf16.gmra.mrb[0].mxu0 %v1406
    %v1512 = vpop.f32.mrb[0].mxu0
    %v1513 = vadd.f32 %v1428, %v1512
    %v1514 = vpop.f32.mrb[0].mxu0
    %v1515 = vpop.f32.mrb[0].mxu0
    %v1516 = vpop.f32.mrb[0].mxu0
    %1517 = vdwg.mxu0
    %v1518 = vmax.f32 %v1513, 0.0
    %v1519 = vpack.c.bf16 %v1518, %v1518
    %v1520 = vld [vmem:[%s9] sm:$0xf]
    %v1521 = vld [vmem:[%s9 + $0x4] sm:$0xf]
    %v1522 = vld [vmem:[%s9 + $0x8] sm:$0xf]
    %v1523 = vld [vmem:[%s9 + $0xc] sm:$0xf]
    %v1524 = vld [vmem:[%s9 + $0x10] sm:$0xf]
    %v1525 = vld [vmem:[%s9 + $0x14] sm:$0xf]
    %v1526 = vld [vmem:[%s9 + $0x18] sm:$0xf]
    %v1527 = vld [vmem:[%s9 + $0x1c] sm:$0xf]
    %v1528 = vld [vmem:[%s9 + $0x20] sm:$0xf]
    %v1529 = vld [vmem:[%s9 + $0x24] sm:$0xf]
    %v1530 = vld [vmem:[%s9 + $0x28] sm:$0xf]
    %v1531 = vld [vmem:[%s9 + $0x2c] sm:$0xf]
    %v1532 = vld [vmem:[%s9 + $0x30] sm:$0xf]
    %v1533 = vld [vmem:[%s9 + $0x34] sm:$0xf]
    %v1534 = vld [vmem:[%s9 + $0x38] sm:$0xf]
    %v1535 = vld [vmem:[%s9 + $0x3c] sm:$0xf]
    %v1536 = vld [vmem:[%s10] sm:$0x1]
    %v1538 = vlaneseq
    %v1539 = vshrl.u32 %v1538, 7
    %v1540 = vsub.s32 0, %v1539
    %v1541 = vrot.slane %v1536, %v1540
    %v1559 = vunpack.c.l.b16 %v1520
    %v1560 = vunpack.c.l.b16 %v1521
    %v1561 = vunpack.c.l.b16 %v1522
    %v1562 = vunpack.c.l.b16 %v1523
    %v1563 = vunpack.c.l.b16 %v1524
    %v1564 = vunpack.c.l.b16 %v1525
    %v1565 = vunpack.c.l.b16 %v1526
    %v1566 = vunpack.c.l.b16 %v1527
    %v1567 = vunpack.c.l.b16 %v1528
    %v1568 = vunpack.c.l.b16 %v1529
    %v1569 = vunpack.c.l.b16 %v1530
    %v1570 = vunpack.c.l.b16 %v1531
    %v1571 = vunpack.c.l.b16 %v1532
    %v1572 = vunpack.c.l.b16 %v1533
    %v1573 = vunpack.c.l.b16 %v1534
    %v1574 = vunpack.c.l.b16 %v1535
    %v1575 = vpack.c.b16 %v1560, %v1559
    %v1576 = vpack.c.b16 %v1562, %v1561
    %v1577 = vpack.c.b16 %v1564, %v1563
    %v1578 = vpack.c.b16 %v1566, %v1565
    %v1579 = vpack.c.b16 %v1568, %v1567
    %v1580 = vpack.c.b16 %v1570, %v1569
    %v1581 = vpack.c.b16 %v1572, %v1571
    %v1582 = vpack.c.b16 %v1574, %v1573
    %1591 = vmatprep.subr.bf16.mxu0 0
    %1592 = vmatpush1.bf16.msra.mxu0 %v1575
    %1593 = vmatprep.subr.bf16.mxu0 0
    %1594 = vmatpush1.bf16.msra.mxu0 %v1576
    %1595 = vmatprep.subr.bf16.mxu0 0
    %1596 = vmatpush1.bf16.msra.mxu0 %v1577
    %1597 = vmatprep.subr.bf16.mxu0 0
    %1598 = vmatpush1.bf16.msra.mxu0 %v1578
    %1599 = vmatprep.subr.bf16.mxu0 0
    %1600 = vmatpush1.bf16.msra.mxu0 %v1579
    %1601 = vmatprep.subr.bf16.mxu0 0
    %1602 = vmatpush1.bf16.msra.mxu0 %v1580
    %1603 = vmatprep.subr.bf16.mxu0 0
    %1604 = vmatpush1.bf16.msra.mxu0 %v1581
    %1605 = vmatprep.subr.bf16.mxu0 0
    %1606 = vmatpush1.bf16.msra.mxu0 %v1582
    %1607 = vmatprep.subr.bf16.mxu0 0
    %1608 = vmatpush1.bf16.msra.mxu0 0
    %1609 = vmatprep.subr.bf16.mxu0 0
    %1610 = vmatpush1.bf16.msra.mxu0 0
    %1611 = vmatprep.subr.bf16.mxu0 0
    %1612 = vmatpush1.bf16.msra.mxu0 0
    %1613 = vmatprep.subr.bf16.mxu0 0
    %1614 = vmatpush1.bf16.msra.mxu0 0
    %1615 = vmatprep.subr.bf16.mxu0 0
    %1616 = vmatpush1.bf16.msra.mxu0 0
    %1617 = vmatprep.subr.bf16.mxu0 0
    %1618 = vmatpush1.bf16.msra.mxu0 0
    %1619 = vmatprep.subr.bf16.mxu0 0
    %1620 = vmatpush1.bf16.msra.mxu0 0
    %1621 = vmatprep.subr.bf16.mxu0 0
    %1622 = vmatpush1.bf16.msra.mxu0 0
    %1623 = vmatprep.mubr.bf16.mxu0 0
    %1624 = vmatmul.mubr.bf16.gmra.mrb[0].mxu0 %v1519
    %v1625 = vpop.f32.mrb[0].mxu0
    %v1626 = vadd.f32 %v1541, %v1625
    %v1627 = vpop.f32.mrb[0].mxu0
    %v1628 = vpop.f32.mrb[0].mxu0
    %v1629 = vpop.f32.mrb[0].mxu0
    %1630 = vdwg.mxu0
    %v1631 = vld [vmem:[#allocation3] sm:$0xff]
    %v1632 = vadd.f32 %v1626, %v1631
    %1633 = vst [vmem:[#allocation11] sm:$0xff] %v1632
    // Predicated region
    $region62: #{tpu_custom_call.1} parent=1 // pred_check
      _
    $region63: #{tpu_custom_call.1} parent=1 // pred_check_branch
      %1635 = sbr.rel (0) target = $region65
    $region64: #{tpu_custom_call.1} parent=1 // pred_region
      %s1637 = ssub.s32 128, 128
      %1638 = vsyncadd [#allocation5], %s1637
      %s1640 = sshll.u32 [#allocation11], 4
      %s1641 = int_to_ptr.vmem [resolvable:$true] %s1640
      %1643 = dma.vmem_to_hbm [thread:$0]  %s1641, 128, %s11, [#allocation5]
    $region65: #{tpu_custom_call.1} parent=1 // pred_fallthru
      _
    // Predicated region
    $region66: #{tpu_custom_call.1} parent=1 // pred_check
      _
    $region67: #{tpu_custom_call.1} parent=1 // pred_check_branch
      %1645 = sbr.rel (0) target = $region69
    $region68: #{tpu_custom_call.1} parent=1 // pred_region
      %1646 = dma.done [#allocation5], 128
    $region69: #{tpu_custom_call.1} parent=1 // pred_fallthru
      _
    %1647 = vsyncpa [#allocation4], 1
    %1648 = vsyncpa [#allocation7], 1
    %1649 = vsyncpa [#allocation10], 1
    %1650 = vsyncpa [#allocation5], 1

</llo_original>
